<compile_context>
chip_gen: v6e
topology: v6e:2x2x1
jax: 0.10.0
libtpu: 0.0.40
codegen_flags: <defaults>
</compile_context>

<pallas_src>
import functools

import jax
import jax.numpy as jnp
from jax.experimental import pallas as pl
from jax.experimental.pallas import tpu as pltpu

LN_EPS = 1e-5
# Scoped-VMEM budget: below v7x's 64 MiB physical VMEM, generous for v5e/v6e.
# TODO(synk): derive per-chip via pltpu.get_tpu_info() for production shapes.
_VMEM_LIMIT = 48 * 1024 * 1024


def _layernorm(x, gamma, beta):
    # x: (rows, D); gamma/beta: (D,) broadcast over rows.
    mean = jnp.mean(x, axis=-1, keepdims=True)
    var = jnp.mean((x - mean) ** 2, axis=-1, keepdims=True)
    return (x - mean) * jax.lax.rsqrt(var + LN_EPS) * gamma + beta


# ------------------------- Fused per-layer kernel ----------------------------

def _layer_kernel(xf_ref,
                  g1_ref, b1_ref, wq_ref, wk_ref, wv_ref, wout_ref,
                  g2_ref, b2_ref, w1_ref, bb1_ref, w2_ref, bb2_ref,
                  gf_ref, bf_ref,
                  o_ref,
                  k_scr, v_scr,
                  *, heads, dim_head, seq_tile, apply_final_ln):
    f32, bf16 = jnp.float32, jnp.bfloat16
    s = pl.program_id(1)
    TQ = seq_tile
    dh = dim_head

    # ---- K/V for the full sequence: computed once per batch element --------
    # (seq axis is the innermost "arbitrary" grid axis; scratch persists.)
    @pl.when(s == 0)
    def _():
        x_f = xf_ref[0]                                              # (N, D)
        ln_f = _layernorm(x_f, g1_ref[0], b1_ref[0]).astype(bf16)
        k_scr[...] = jnp.dot(ln_f, wk_ref[...],
                             preferred_element_type=f32).astype(bf16)
        v_scr[...] = jnp.dot(ln_f, wv_ref[...],
                             preferred_element_type=f32).astype(bf16)

    # ---- Query / residual rows owned by this grid step ----------------------
    row0 = pl.multiple_of(s * TQ, TQ)
    x_q = xf_ref[0, pl.ds(row0, TQ), :]                              # (TQ, D) f32
    ln_q = _layernorm(x_q, g1_ref[0], b1_ref[0]).astype(bf16)

    # Single dense QKV-style projection for Q (scale folded into Wq).
    q = jnp.dot(ln_q, wq_ref[...],
                preferred_element_type=f32).astype(bf16)             # (TQ, inner)

    k_full = k_scr[...]                                              # (N, inner) bf16
    v_full = v_scr[...]                                              # (N, inner) bf16

    # ---- Per-head attention (static unrolled loop; 2-D MXU ops only) -------
    outs = []
    for h in range(heads):
        qh = q[:, h * dh:(h + 1) * dh]                               # (TQ, dh)
        kh = k_full[:, h * dh:(h + 1) * dh]                          # (N, dh)
        vh = v_full[:, h * dh:(h + 1) * dh]                          # (N, dh)
        dots = jnp.einsum('qd,kd->qk', qh, kh,
                          preferred_element_type=f32)                # (TQ, N)
        dots = dots - jnp.max(dots, axis=-1, keepdims=True)
        p = jnp.exp(dots)
        p = p * pl.reciprocal(jnp.sum(p, axis=-1, keepdims=True), approx=True)
        outs.append(jnp.dot(p.astype(bf16), vh,
                            preferred_element_type=f32).astype(bf16))  # (TQ, dh)

    attn = outs[0] if heads == 1 else jnp.concatenate(outs, axis=-1)  # (TQ, inner)

    # Fused out-projection over concatenated heads (contraction = inner) + residual.
    y = jnp.dot(attn, wout_ref[...], preferred_element_type=f32) + x_q  # (TQ, D)

    # ---- FeedForward (+ residual) -------------------------------------------
    ln2 = _layernorm(y, g2_ref[0], b2_ref[0]).astype(bf16)
    h1 = jnp.dot(ln2, w1_ref[...], preferred_element_type=f32) + bb1_ref[0]
    h1 = jnp.maximum(h1, 0.0).astype(bf16)                           # ReLU
    ff = jnp.dot(h1, w2_ref[...], preferred_element_type=f32) + bb2_ref[0]
    out = ff + y

    if apply_final_ln:                                               # static flag
        out = _layernorm(out, gf_ref[0], bf_ref[0])

    o_ref[0] = out.astype(o_ref.dtype)


def transformer_layer(x, lw, final_g, final_b, *, heads, dim_head, seq_tile,
                      apply_final_ln):
    B, N, D = x.shape
    inner = heads * dim_head
    mlp = lw["w1"].shape[1]
    TQ = seq_tile
    grid = (B, N // TQ)

    kernel = functools.partial(_layer_kernel, heads=heads, dim_head=dim_head,
                               seq_tile=TQ, apply_final_ln=apply_final_ln)

    def cmap(shape):
        """BlockSpec for a grid-invariant input (weights / LN params)."""
        ndim = len(shape)
        return pl.BlockSpec(shape, lambda b, s, _n=ndim: (0,) * _n)

    return pl.pallas_call(
        kernel,
        out_shape=jax.ShapeDtypeStruct((B, N, D), x.dtype),
        grid=grid,
        in_specs=[
            pl.BlockSpec((1, N, D), lambda b, s: (b, 0, 0)),   # full sequence (q rows sliced in-kernel)
            cmap((1, D)), cmap((1, D)),                        # attn LN gamma/beta
            cmap((D, inner)), cmap((D, inner)), cmap((D, inner)),  # Wq (pre-scaled), Wk, Wv
            cmap((inner, D)),                                  # Wout
            cmap((1, D)), cmap((1, D)),                        # ff LN gamma/beta
            cmap((D, mlp)), cmap((1, mlp)),                    # w1, b1
            cmap((mlp, D)), cmap((1, D)),                      # w2, b2
            cmap((1, D)), cmap((1, D)),                        # final LN gamma/beta (used on last layer only)
        ],
        out_specs=pl.BlockSpec((1, TQ, D), lambda b, s: (b, s, 0)),
        scratch_shapes=[
            pltpu.VMEM((N, inner), jnp.bfloat16),              # K cache (per batch element)
            pltpu.VMEM((N, inner), jnp.bfloat16),              # V cache
        ],
        compiler_params=pltpu.CompilerParams(
            dimension_semantics=("parallel", "arbitrary"),
            vmem_limit_bytes=_VMEM_LIMIT),
    )(x,
      lw["attn_ln_g"], lw["attn_ln_b"], lw["wq"], lw["wk"], lw["wv"], lw["wout"],
      lw["ff_ln_g"], lw["ff_ln_b"], lw["w1"], lw["b1"], lw["w2"], lw["b2"],
      final_g, final_b)


# ------------------------------ Full Transformer -----------------------------

def init_transformer_params(key, dim, depth, heads, dim_head, mlp_dim):
    inner = heads * dim_head
    params = {"layers": []}
    for _ in range(depth):
        key, k1, k2, k3, k4 = jax.random.split(key, 5)
        layer = {
            # Attention
            "attn_ln_g": jnp.ones((1, dim), jnp.float32),
            "attn_ln_b": jnp.zeros((1, dim), jnp.float32),
            "w_qkv": 0.05 * jax.random.normal(k1, (dim, 3 * inner), jnp.float32),
            "w_out": 0.05 * jax.random.normal(k2, (inner, dim), jnp.float32),
            # FeedForward
            "ff_ln_g": jnp.ones((1, dim), jnp.float32),
            "ff_ln_b": jnp.zeros((1, dim), jnp.float32),
            "w1": 0.05 * jax.random.normal(k3, (dim, mlp_dim), jnp.float32),
            "b1": jnp.zeros((1, mlp_dim), jnp.float32),
            "w2": 0.05 * jax.random.normal(k4, (mlp_dim, dim), jnp.float32),
            "b2": jnp.zeros((1, dim), jnp.float32),
        }
        params["layers"].append(layer)
    params["final_ln_g"] = jnp.ones((1, dim), jnp.float32)
    params["final_ln_b"] = jnp.zeros((1, dim), jnp.float32)
    return params


def _prep_layer(layer, heads, dim_head):
    """Split Wqkv into Wq/Wk/Wv (128-aligned in the wrapper), fold 1/sqrt(dh)
    into Wq, cast matmul weights to bf16.  Column layout of each chunk is
    (h d), matching `rearrange('b n (h d) -> b h n d')` in the reference."""
    inner = heads * dim_head
    scale = dim_head ** (-0.5)
    w_qkv = layer["w_qkv"]
    return {
        "attn_ln_g": layer["attn_ln_g"], "attn_ln_b": layer["attn_ln_b"],
        "wq": (w_qkv[:, :inner] * scale).astype(jnp.bfloat16),
        "wk": w_qkv[:, inner:2 * inner].astype(jnp.bfloat16),
        "wv": w_qkv[:, 2 * inner:].astype(jnp.bfloat16),
        # concat-over-heads @ w_out  ==  sum_h attn_h @ w_out[h*dh:(h+1)*dh]
        "wout": layer["w_out"].astype(jnp.bfloat16),
        "ff_ln_g": layer["ff_ln_g"], "ff_ln_b": layer["ff_ln_b"],
        "w1": layer["w1"].astype(jnp.bfloat16), "b1": layer["b1"],
        "w2": layer["w2"].astype(jnp.bfloat16), "b2": layer["b2"],
    }


def _pick_seq_tile(N, max_tile=512):
    if N <= max_tile:
        return N
    for t in range(max_tile, 7, -8):
        if N % t == 0:
            return t
    return N


def transformer_forward(x, params, *, heads, dim_head):
    kernel_layers = [_prep_layer(l, heads, dim_head) for l in params["layers"]]
    tq = _pick_seq_tile(x.shape[1])
    final_g, final_b = params["final_ln_g"], params["final_ln_b"]
    n_layers = len(kernel_layers)
    for i, lw in enumerate(kernel_layers):
        x = transformer_layer(x, lw, final_g, final_b,
                              heads=heads, dim_head=dim_head, seq_tile=tq,
                              apply_final_ln=(i == n_layers - 1))
    return x


# ------------------------------ Pure-JAX reference ---------------------------

def _ref_ln(x, g, b):
    mu = jnp.mean(x, -1, keepdims=True)
    var = jnp.mean((x - mu) ** 2, -1, keepdims=True)
    return (x - mu) / jnp.sqrt(var + LN_EPS) * g + b


def transformer_reference(x, params, *, heads, dim_head):
    B, N, D = x.shape
    inner = heads * dim_head
    scale = dim_head ** (-0.5)
    for layer in params["layers"]:
        xn = _ref_ln(x, layer["attn_ln_g"], layer["attn_ln_b"])
        qkv = xn @ layer["w_qkv"]
        q, k, v = jnp.split(qkv, 3, axis=-1)
        def heads_view(t):
            return t.reshape(B, N, heads, dim_head).transpose(0, 2, 1, 3)
        q, k, v = map(heads_view, (q, k, v))
        dots = jnp.einsum("bhnd,bhmd->bhnm", q, k) * scale
        attn = jax.nn.softmax(dots, axis=-1)
        out = jnp.einsum("bhnm,bhmd->bhnd", attn, v)
        out = out.transpose(0, 2, 1, 3).reshape(B, N, inner)
        x = out @ layer["w_out"] + x
        xn = _ref_ln(x, layer["ff_ln_g"], layer["ff_ln_b"])
        h = jnp.maximum(xn @ layer["w1"] + layer["b1"], 0.0)
        x = h @ layer["w2"] + layer["b2"] + x
    return _ref_ln(x, params["final_ln_g"], params["final_ln_b"])


if __name__ == "__main__":
    # Small shapes consistent with the module.
    B, N = 2, 8
    dim, depth, heads, dim_head, mlp_dim = 32, 2, 2, 16, 64

    key = jax.random.PRNGKey(0)
    key, kx, kp = jax.random.split(key, 3)
    x = jax.random.normal(kx, (B, N, dim), jnp.float32)
    params = init_transformer_params(kp, dim, depth, heads, dim_head, mlp_dim)

    out = transformer_forward(x, params, heads=heads, dim_head=dim_head)
    out = jax.block_until_ready(out)

    ref = transformer_reference(x, params, heads=heads, dim_head=dim_head)
    assert out.shape == (B, N, dim)
    # bf16 MXU inputs + approx-reciprocal softmax -> 2e-2 tolerance vs fp32 ref.
    assert jnp.allclose(out, ref, rtol=2e-2, atol=2e-2), "mismatch vs reference"

    print("KERNEL_OK")
</pallas_src>

<mosaic_0001>
module attributes {stable_mosaic.version = 11 : i64} {
  func.func @_layer_kernel(%arg0: i32, %arg1: i32, %arg2: memref<1x8x32xf32, #tpu.memory_space<vmem>>, %arg3: memref<1x32xf32, #tpu.memory_space<vmem>>, %arg4: memref<1x32xf32, #tpu.memory_space<vmem>>, %arg5: memref<32x32xbf16, #tpu.memory_space<vmem>>, %arg6: memref<32x32xbf16, #tpu.memory_space<vmem>>, %arg7: memref<32x32xbf16, #tpu.memory_space<vmem>>, %arg8: memref<32x32xbf16, #tpu.memory_space<vmem>>, %arg9: memref<1x32xf32, #tpu.memory_space<vmem>>, %arg10: memref<1x32xf32, #tpu.memory_space<vmem>>, %arg11: memref<32x64xbf16, #tpu.memory_space<vmem>>, %arg12: memref<1x64xf32, #tpu.memory_space<vmem>>, %arg13: memref<64x32xbf16, #tpu.memory_space<vmem>>, %arg14: memref<1x32xf32, #tpu.memory_space<vmem>>, %arg15: memref<1x32xf32, #tpu.memory_space<vmem>>, %arg16: memref<1x32xf32, #tpu.memory_space<vmem>>, %arg17: memref<1x8x32xf32, #tpu.memory_space<vmem>>, %arg18: memref<8x32xbf16, #tpu.memory_space<vmem>>, %arg19: memref<8x32xbf16, #tpu.memory_space<vmem>>) attributes {dimension_semantics = [#tpu.dimension_semantics<parallel>, #tpu.dimension_semantics<arbitrary>], iteration_bounds = array<i64: 2, 1>, scalar_prefetch = 0 : i64, scratch_operands = 2 : i64, tpu.core_type = #tpu.core_type<tc>, window_params = [{transform_indices = @transform_0, window_bounds = array<i64: 1, 8, 32>}, {pipeline_mode = #tpu.pipeline_mode<synchronous>, transform_indices = @transform_1, window_bounds = array<i64: 1, 32>}, {pipeline_mode = #tpu.pipeline_mode<synchronous>, transform_indices = @transform_2, window_bounds = array<i64: 1, 32>}, {pipeline_mode = #tpu.pipeline_mode<synchronous>, transform_indices = @transform_3, window_bounds = array<i64: 32, 32>}, {pipeline_mode = #tpu.pipeline_mode<synchronous>, transform_indices = @transform_4, window_bounds = array<i64: 32, 32>}, {pipeline_mode = #tpu.pipeline_mode<synchronous>, transform_indices = @transform_5, window_bounds = array<i64: 32, 32>}, {pipeline_mode = #tpu.pipeline_mode<synchronous>, transform_indices = @transform_6, window_bounds = array<i64: 32, 32>}, {pipeline_mode = #tpu.pipeline_mode<synchronous>, transform_indices = @transform_7, window_bounds = array<i64: 1, 32>}, {pipeline_mode = #tpu.pipeline_mode<synchronous>, transform_indices = @transform_8, window_bounds = array<i64: 1, 32>}, {pipeline_mode = #tpu.pipeline_mode<synchronous>, transform_indices = @transform_9, window_bounds = array<i64: 32, 64>}, {pipeline_mode = #tpu.pipeline_mode<synchronous>, transform_indices = @transform_10, window_bounds = array<i64: 1, 64>}, {pipeline_mode = #tpu.pipeline_mode<synchronous>, transform_indices = @transform_11, window_bounds = array<i64: 64, 32>}, {pipeline_mode = #tpu.pipeline_mode<synchronous>, transform_indices = @transform_12, window_bounds = array<i64: 1, 32>}, {pipeline_mode = #tpu.pipeline_mode<synchronous>, transform_indices = @transform_13, window_bounds = array<i64: 1, 32>}, {pipeline_mode = #tpu.pipeline_mode<synchronous>, transform_indices = @transform_14, window_bounds = array<i64: 1, 32>}, {transform_indices = @transform_15, window_bounds = array<i64: 1, 8, 32>}]} {
    %c0_i32 = arith.constant 0 : i32
    %0 = arith.cmpi eq, %arg1, %c0_i32 : i32
    %1 = arith.extui %0 : i1 to i32
    %c0_i32_0 = arith.constant 0 : i32
    %2 = arith.cmpi ne, %1, %c0_i32_0 : i32
    scf.if %2 {
      %c0_51 = arith.constant 0 : index
      %c0_52 = arith.constant 0 : index
      %c0_53 = arith.constant 0 : index
      %130 = vector.load %arg2[%c0_51, %c0_52, %c0_53] : memref<1x8x32xf32, #tpu.memory_space<vmem>>, vector<1x8x32xf32>
      %131 = vector.shape_cast %130 : vector<1x8x32xf32> to vector<8x32xf32>
      %c0_54 = arith.constant 0 : index
      %c0_55 = arith.constant 0 : index
      %132 = vector.load %arg3[%c0_54, %c0_55] : memref<1x32xf32, #tpu.memory_space<vmem>>, vector<1x32xf32>
      %133 = vector.shape_cast %132 : vector<1x32xf32> to vector<32xf32>
      %c0_56 = arith.constant 0 : index
      %c0_57 = arith.constant 0 : index
      %134 = vector.load %arg4[%c0_56, %c0_57] : memref<1x32xf32, #tpu.memory_space<vmem>>, vector<1x32xf32>
      %135 = vector.shape_cast %134 : vector<1x32xf32> to vector<32xf32>
      %cst_58 = arith.constant dense<0.000000e+00> : vector<8xf32>
      %136 = vector.multi_reduction <add>, %131, %cst_58 [1] : vector<8x32xf32> to vector<8xf32>
      %137 = vector.shape_cast %136 : vector<8xf32> to vector<8x1xf32>
      %cst_59 = arith.constant 3.200000e+01 : f32
      %138 = vector.broadcast %cst_59 : f32 to vector<8x1xf32>
      %139 = arith.divf %137, %138 : vector<8x1xf32>
      %140 = vector.broadcast %139 : vector<8x1xf32> to vector<8x32xf32>
      %141 = arith.subf %131, %140 : vector<8x32xf32>
      %142 = arith.mulf %141, %141 : vector<8x32xf32>
      %cst_60 = arith.constant dense<0.000000e+00> : vector<8xf32>
      %143 = vector.multi_reduction <add>, %142, %cst_60 [1] : vector<8x32xf32> to vector<8xf32>
      %144 = vector.shape_cast %143 : vector<8xf32> to vector<8x1xf32>
      %cst_61 = arith.constant 3.200000e+01 : f32
      %145 = vector.broadcast %cst_61 : f32 to vector<8x1xf32>
      %146 = arith.divf %144, %145 : vector<8x1xf32>
      %147 = vector.broadcast %139 : vector<8x1xf32> to vector<8x32xf32>
      %148 = arith.subf %131, %147 : vector<8x32xf32>
      %cst_62 = arith.constant 9.99999974E-6 : f32
      %149 = vector.broadcast %cst_62 : f32 to vector<8x1xf32>
      %150 = arith.addf %146, %149 : vector<8x1xf32>
      %151 = math.rsqrt %150 : vector<8x1xf32>
      %152 = vector.broadcast %151 : vector<8x1xf32> to vector<8x32xf32>
      %153 = arith.mulf %148, %152 : vector<8x32xf32>
      %154 = vector.shape_cast %133 : vector<32xf32> to vector<1x32xf32>
      %155 = vector.broadcast %154 : vector<1x32xf32> to vector<8x32xf32>
      %156 = arith.mulf %153, %155 : vector<8x32xf32>
      %157 = vector.shape_cast %135 : vector<32xf32> to vector<1x32xf32>
      %158 = vector.broadcast %157 : vector<1x32xf32> to vector<8x32xf32>
      %159 = arith.addf %156, %158 : vector<8x32xf32>
      %160 = arith.truncf %159 : vector<8x32xf32> to vector<8x32xbf16>
      %c0_63 = arith.constant 0 : index
      %c0_64 = arith.constant 0 : index
      %161 = vector.load %arg6[%c0_63, %c0_64] : memref<32x32xbf16, #tpu.memory_space<vmem>>, vector<32x32xbf16>
      %cst_65 = arith.constant dense<0.000000e+00> : vector<8x32xf32>
      %162 = tpu.matmul %160, %161, %cst_65 {dimension_numbers = #tpu.dot_dimension_numbers<[1], [0], [0], [1], [0, 0, 1, 1], [], []>} : vector<8x32xbf16>, vector<32x32xbf16>, vector<8x32xf32> -> vector<8x32xf32>
      %163 = arith.truncf %162 : vector<8x32xf32> to vector<8x32xbf16>
      %c0_66 = arith.constant 0 : index
      %c0_67 = arith.constant 0 : index
      %164 = vector.load %arg18[%c0_66, %c0_67] : memref<8x32xbf16, #tpu.memory_space<vmem>>, vector<8x32xbf16>
      tpu.vector_store %arg18[%c0_66, %c0_67], %163 {strides = array<i32>} : memref<8x32xbf16, #tpu.memory_space<vmem>>, vector<8x32xbf16>,
      %c0_68 = arith.constant 0 : index
      %c0_69 = arith.constant 0 : index
      %165 = vector.load %arg7[%c0_68, %c0_69] : memref<32x32xbf16, #tpu.memory_space<vmem>>, vector<32x32xbf16>
      %cst_70 = arith.constant dense<0.000000e+00> : vector<8x32xf32>
      %166 = tpu.matmul %160, %165, %cst_70 {dimension_numbers = #tpu.dot_dimension_numbers<[1], [0], [0], [1], [0, 0, 1, 1], [], []>} : vector<8x32xbf16>, vector<32x32xbf16>, vector<8x32xf32> -> vector<8x32xf32>
      %167 = arith.truncf %166 : vector<8x32xf32> to vector<8x32xbf16>
      %c0_71 = arith.constant 0 : index
      %c0_72 = arith.constant 0 : index
      %168 = vector.load %arg19[%c0_71, %c0_72] : memref<8x32xbf16, #tpu.memory_space<vmem>>, vector<8x32xbf16>
      tpu.vector_store %arg19[%c0_71, %c0_72], %167 {strides = array<i32>} : memref<8x32xbf16, #tpu.memory_space<vmem>>, vector<8x32xbf16>,
    } else {
    }
    %c8_i32 = arith.constant 8 : i32
    %3 = arith.muli %arg1, %c8_i32 : i32
    %4 = tpu.assume_multiple %3, 8 : i32
    %c0 = arith.constant 0 : index
    %5 = arith.index_cast %4 : i32 to index
    %c0_1 = arith.constant 0 : index
    %6 = vector.load %arg2[%c0, %5, %c0_1] : memref<1x8x32xf32, #tpu.memory_space<vmem>>, vector<1x8x32xf32>
    %7 = vector.shape_cast %6 : vector<1x8x32xf32> to vector<8x32xf32>
    %c0_2 = arith.constant 0 : index
    %c0_3 = arith.constant 0 : index
    %8 = vector.load %arg3[%c0_2, %c0_3] : memref<1x32xf32, #tpu.memory_space<vmem>>, vector<1x32xf32>
    %9 = vector.shape_cast %8 : vector<1x32xf32> to vector<32xf32>
    %c0_4 = arith.constant 0 : index
    %c0_5 = arith.constant 0 : index
    %10 = vector.load %arg4[%c0_4, %c0_5] : memref<1x32xf32, #tpu.memory_space<vmem>>, vector<1x32xf32>
    %11 = vector.shape_cast %10 : vector<1x32xf32> to vector<32xf32>
    %cst = arith.constant dense<0.000000e+00> : vector<8xf32>
    %12 = vector.multi_reduction <add>, %7, %cst [1] : vector<8x32xf32> to vector<8xf32>
    %13 = vector.shape_cast %12 : vector<8xf32> to vector<8x1xf32>
    %cst_6 = arith.constant 3.200000e+01 : f32
    %14 = vector.broadcast %cst_6 : f32 to vector<8x1xf32>
    %15 = arith.divf %13, %14 : vector<8x1xf32>
    %16 = vector.broadcast %15 : vector<8x1xf32> to vector<8x32xf32>
    %17 = arith.subf %7, %16 : vector<8x32xf32>
    %18 = arith.mulf %17, %17 : vector<8x32xf32>
    %cst_7 = arith.constant dense<0.000000e+00> : vector<8xf32>
    %19 = vector.multi_reduction <add>, %18, %cst_7 [1] : vector<8x32xf32> to vector<8xf32>
    %20 = vector.shape_cast %19 : vector<8xf32> to vector<8x1xf32>
    %cst_8 = arith.constant 3.200000e+01 : f32
    %21 = vector.broadcast %cst_8 : f32 to vector<8x1xf32>
    %22 = arith.divf %20, %21 : vector<8x1xf32>
    %23 = vector.broadcast %15 : vector<8x1xf32> to vector<8x32xf32>
    %24 = arith.subf %7, %23 : vector<8x32xf32>
    %cst_9 = arith.constant 9.99999974E-6 : f32
    %25 = vector.broadcast %cst_9 : f32 to vector<8x1xf32>
    %26 = arith.addf %22, %25 : vector<8x1xf32>
    %27 = math.rsqrt %26 : vector<8x1xf32>
    %28 = vector.broadcast %27 : vector<8x1xf32> to vector<8x32xf32>
    %29 = arith.mulf %24, %28 : vector<8x32xf32>
    %30 = vector.shape_cast %9 : vector<32xf32> to vector<1x32xf32>
    %31 = vector.broadcast %30 : vector<1x32xf32> to vector<8x32xf32>
    %32 = arith.mulf %29, %31 : vector<8x32xf32>
    %33 = vector.shape_cast %11 : vector<32xf32> to vector<1x32xf32>
    %34 = vector.broadcast %33 : vector<1x32xf32> to vector<8x32xf32>
    %35 = arith.addf %32, %34 : vector<8x32xf32>
    %36 = arith.truncf %35 : vector<8x32xf32> to vector<8x32xbf16>
    %c0_10 = arith.constant 0 : index
    %c0_11 = arith.constant 0 : index
    %37 = vector.load %arg5[%c0_10, %c0_11] : memref<32x32xbf16, #tpu.memory_space<vmem>>, vector<32x32xbf16>
    %cst_12 = arith.constant dense<0.000000e+00> : vector<8x32xf32>
    %38 = tpu.matmul %36, %37, %cst_12 {dimension_numbers = #tpu.dot_dimension_numbers<[1], [0], [0], [1], [0, 0, 1, 1], [], []>} : vector<8x32xbf16>, vector<32x32xbf16>, vector<8x32xf32> -> vector<8x32xf32>
    %39 = arith.truncf %38 : vector<8x32xf32> to vector<8x32xbf16>
    %c0_13 = arith.constant 0 : index
    %c0_14 = arith.constant 0 : index
    %40 = vector.load %arg18[%c0_13, %c0_14] : memref<8x32xbf16, #tpu.memory_space<vmem>>, vector<8x32xbf16>
    %c0_15 = arith.constant 0 : index
    %c0_16 = arith.constant 0 : index
    %41 = vector.load %arg19[%c0_15, %c0_16] : memref<8x32xbf16, #tpu.memory_space<vmem>>, vector<8x32xbf16>
    %42 = vector.extract_strided_slice %39 {offsets = [0, 0], sizes = [8, 16], strides = [1, 1]} : vector<8x32xbf16> to vector<8x16xbf16>
    %43 = vector.extract_strided_slice %40 {offsets = [0, 0], sizes = [8, 16], strides = [1, 1]} : vector<8x32xbf16> to vector<8x16xbf16>
    %44 = vector.extract_strided_slice %41 {offsets = [0, 0], sizes = [8, 16], strides = [1, 1]} : vector<8x32xbf16> to vector<8x16xbf16>
    "tpu.trace_start"() <{level = 10 : i32, message = "qd,kd->qk"}> : () -> ()
    %cst_17 = arith.constant dense<0.000000e+00> : vector<8x8xf32>
    %45 = tpu.matmul %42, %43, %cst_17 {dimension_numbers = #tpu.dot_dimension_numbers<[1], [1], [0], [0], [0, 0, 1, 0], [], []>} : vector<8x16xbf16>, vector<8x16xbf16>, vector<8x8xf32> -> vector<8x8xf32>
    "tpu.trace_stop"() : () -> ()
    %cst_18 = arith.constant dense<0xFF800000> : vector<8xf32>
    %46 = vector.multi_reduction <maximumf>, %45, %cst_18 [1] : vector<8x8xf32> to vector<8xf32>
    %47 = vector.shape_cast %46 : vector<8xf32> to vector<8x1xf32>
    %48 = vector.broadcast %47 : vector<8x1xf32> to vector<8x8xf32>
    %49 = arith.subf %45, %48 : vector<8x8xf32>
    %50 = math.exp %49 : vector<8x8xf32>
    %cst_19 = arith.constant dense<0.000000e+00> : vector<8xf32>
    %51 = vector.multi_reduction <add>, %50, %cst_19 [1] : vector<8x8xf32> to vector<8xf32>
    %52 = vector.shape_cast %51 : vector<8xf32> to vector<8x1xf32>
    %53 = tpu.reciprocal %52 {approx = true} : vector<8x1xf32> -> vector<8x1xf32>
    %54 = vector.broadcast %53 : vector<8x1xf32> to vector<8x8xf32>
    %55 = arith.mulf %50, %54 : vector<8x8xf32>
    %56 = arith.truncf %55 : vector<8x8xf32> to vector<8x8xbf16>
    %cst_20 = arith.constant dense<0.000000e+00> : vector<8x16xf32>
    %57 = tpu.matmul %56, %44, %cst_20 {dimension_numbers = #tpu.dot_dimension_numbers<[1], [0], [0], [1], [0, 0, 1, 1], [], []>} : vector<8x8xbf16>, vector<8x16xbf16>, vector<8x16xf32> -> vector<8x16xf32>
    %58 = arith.truncf %57 : vector<8x16xf32> to vector<8x16xbf16>
    %59 = vector.extract_strided_slice %39 {offsets = [0, 16], sizes = [8, 16], strides = [1, 1]} : vector<8x32xbf16> to vector<8x16xbf16>
    %60 = vector.extract_strided_slice %40 {offsets = [0, 16], sizes = [8, 16], strides = [1, 1]} : vector<8x32xbf16> to vector<8x16xbf16>
    %61 = vector.extract_strided_slice %41 {offsets = [0, 16], sizes = [8, 16], strides = [1, 1]} : vector<8x32xbf16> to vector<8x16xbf16>
    "tpu.trace_start"() <{level = 10 : i32, message = "qd,kd->qk"}> : () -> ()
    %cst_21 = arith.constant dense<0.000000e+00> : vector<8x8xf32>
    %62 = tpu.matmul %59, %60, %cst_21 {dimension_numbers = #tpu.dot_dimension_numbers<[1], [1], [0], [0], [0, 0, 1, 0], [], []>} : vector<8x16xbf16>, vector<8x16xbf16>, vector<8x8xf32> -> vector<8x8xf32>
    "tpu.trace_stop"() : () -> ()
    %cst_22 = arith.constant dense<0xFF800000> : vector<8xf32>
    %63 = vector.multi_reduction <maximumf>, %62, %cst_22 [1] : vector<8x8xf32> to vector<8xf32>
    %64 = vector.shape_cast %63 : vector<8xf32> to vector<8x1xf32>
    %65 = vector.broadcast %64 : vector<8x1xf32> to vector<8x8xf32>
    %66 = arith.subf %62, %65 : vector<8x8xf32>
    %67 = math.exp %66 : vector<8x8xf32>
    %cst_23 = arith.constant dense<0.000000e+00> : vector<8xf32>
    %68 = vector.multi_reduction <add>, %67, %cst_23 [1] : vector<8x8xf32> to vector<8xf32>
    %69 = vector.shape_cast %68 : vector<8xf32> to vector<8x1xf32>
    %70 = tpu.reciprocal %69 {approx = true} : vector<8x1xf32> -> vector<8x1xf32>
    %71 = vector.broadcast %70 : vector<8x1xf32> to vector<8x8xf32>
    %72 = arith.mulf %67, %71 : vector<8x8xf32>
    %73 = arith.truncf %72 : vector<8x8xf32> to vector<8x8xbf16>
    %cst_24 = arith.constant dense<0.000000e+00> : vector<8x16xf32>
    %74 = tpu.matmul %73, %61, %cst_24 {dimension_numbers = #tpu.dot_dimension_numbers<[1], [0], [0], [1], [0, 0, 1, 1], [], []>} : vector<8x8xbf16>, vector<8x16xbf16>, vector<8x16xf32> -> vector<8x16xf32>
    %75 = arith.truncf %74 : vector<8x16xf32> to vector<8x16xbf16>
    %76 = tpu.concatenate %58, %75 in 1 : vector<8x16xbf16>, vector<8x16xbf16> -> vector<8x32xbf16>
    %c0_25 = arith.constant 0 : index
    %c0_26 = arith.constant 0 : index
    %77 = vector.load %arg8[%c0_25, %c0_26] : memref<32x32xbf16, #tpu.memory_space<vmem>>, vector<32x32xbf16>
    %cst_27 = arith.constant dense<0.000000e+00> : vector<8x32xf32>
    %78 = tpu.matmul %76, %77, %cst_27 {dimension_numbers = #tpu.dot_dimension_numbers<[1], [0], [0], [1], [0, 0, 1, 1], [], []>} : vector<8x32xbf16>, vector<32x32xbf16>, vector<8x32xf32> -> vector<8x32xf32>
    %79 = arith.addf %78, %7 : vector<8x32xf32>
    %c0_28 = arith.constant 0 : index
    %c0_29 = arith.constant 0 : index
    %80 = vector.load %arg9[%c0_28, %c0_29] : memref<1x32xf32, #tpu.memory_space<vmem>>, vector<1x32xf32>
    %81 = vector.shape_cast %80 : vector<1x32xf32> to vector<32xf32>
    %c0_30 = arith.constant 0 : index
    %c0_31 = arith.constant 0 : index
    %82 = vector.load %arg10[%c0_30, %c0_31] : memref<1x32xf32, #tpu.memory_space<vmem>>, vector<1x32xf32>
    %83 = vector.shape_cast %82 : vector<1x32xf32> to vector<32xf32>
    %cst_32 = arith.constant dense<0.000000e+00> : vector<8xf32>
    %84 = vector.multi_reduction <add>, %79, %cst_32 [1] : vector<8x32xf32> to vector<8xf32>
    %85 = vector.shape_cast %84 : vector<8xf32> to vector<8x1xf32>
    %cst_33 = arith.constant 3.200000e+01 : f32
    %86 = vector.broadcast %cst_33 : f32 to vector<8x1xf32>
    %87 = arith.divf %85, %86 : vector<8x1xf32>
    %88 = vector.broadcast %87 : vector<8x1xf32> to vector<8x32xf32>
    %89 = arith.subf %79, %88 : vector<8x32xf32>
    %90 = arith.mulf %89, %89 : vector<8x32xf32>
    %cst_34 = arith.constant dense<0.000000e+00> : vector<8xf32>
    %91 = vector.multi_reduction <add>, %90, %cst_34 [1] : vector<8x32xf32> to vector<8xf32>
    %92 = vector.shape_cast %91 : vector<8xf32> to vector<8x1xf32>
    %cst_35 = arith.constant 3.200000e+01 : f32
    %93 = vector.broadcast %cst_35 : f32 to vector<8x1xf32>
    %94 = arith.divf %92, %93 : vector<8x1xf32>
    %95 = vector.broadcast %87 : vector<8x1xf32> to vector<8x32xf32>
    %96 = arith.subf %79, %95 : vector<8x32xf32>
    %cst_36 = arith.constant 9.99999974E-6 : f32
    %97 = vector.broadcast %cst_36 : f32 to vector<8x1xf32>
    %98 = arith.addf %94, %97 : vector<8x1xf32>
    %99 = math.rsqrt %98 : vector<8x1xf32>
    %100 = vector.broadcast %99 : vector<8x1xf32> to vector<8x32xf32>
    %101 = arith.mulf %96, %100 : vector<8x32xf32>
    %102 = vector.shape_cast %81 : vector<32xf32> to vector<1x32xf32>
    %103 = vector.broadcast %102 : vector<1x32xf32> to vector<8x32xf32>
    %104 = arith.mulf %101, %103 : vector<8x32xf32>
    %105 = vector.shape_cast %83 : vector<32xf32> to vector<1x32xf32>
    %106 = vector.broadcast %105 : vector<1x32xf32> to vector<8x32xf32>
    %107 = arith.addf %104, %106 : vector<8x32xf32>
    %108 = arith.truncf %107 : vector<8x32xf32> to vector<8x32xbf16>
    %c0_37 = arith.constant 0 : index
    %c0_38 = arith.constant 0 : index
    %109 = vector.load %arg11[%c0_37, %c0_38] : memref<32x64xbf16, #tpu.memory_space<vmem>>, vector<32x64xbf16>
    %cst_39 = arith.constant dense<0.000000e+00> : vector<8x64xf32>
    %110 = tpu.matmul %108, %109, %cst_39 {dimension_numbers = #tpu.dot_dimension_numbers<[1], [0], [0], [1], [0, 0, 1, 1], [], []>} : vector<8x32xbf16>, vector<32x64xbf16>, vector<8x64xf32> -> vector<8x64xf32>
    %c0_40 = arith.constant 0 : index
    %c0_41 = arith.constant 0 : index
    %111 = vector.load %arg12[%c0_40, %c0_41] : memref<1x64xf32, #tpu.memory_space<vmem>>, vector<1x64xf32>
    %112 = vector.shape_cast %111 : vector<1x64xf32> to vector<64xf32>
    %113 = vector.shape_cast %112 : vector<64xf32> to vector<1x64xf32>
    %114 = vector.broadcast %113 : vector<1x64xf32> to vector<8x64xf32>
    %115 = arith.addf %110, %114 : vector<8x64xf32>
    %cst_42 = arith.constant 0.000000e+00 : f32
    %116 = vector.broadcast %cst_42 : f32 to vector<8x64xf32>
    %117 = arith.maximumf %115, %116 : vector<8x64xf32>
    %118 = arith.truncf %117 : vector<8x64xf32> to vector<8x64xbf16>
    %c0_43 = arith.constant 0 : index
    %c0_44 = arith.constant 0 : index
    %119 = vector.load %arg13[%c0_43, %c0_44] : memref<64x32xbf16, #tpu.memory_space<vmem>>, vector<64x32xbf16>
    %cst_45 = arith.constant dense<0.000000e+00> : vector<8x32xf32>
    %120 = tpu.matmul %118, %119, %cst_45 {dimension_numbers = #tpu.dot_dimension_numbers<[1], [0], [0], [1], [0, 0, 1, 1], [], []>} : vector<8x64xbf16>, vector<64x32xbf16>, vector<8x32xf32> -> vector<8x32xf32>
    %c0_46 = arith.constant 0 : index
    %c0_47 = arith.constant 0 : index
    %121 = vector.load %arg14[%c0_46, %c0_47] : memref<1x32xf32, #tpu.memory_space<vmem>>, vector<1x32xf32>
    %122 = vector.shape_cast %121 : vector<1x32xf32> to vector<32xf32>
    %123 = vector.shape_cast %122 : vector<32xf32> to vector<1x32xf32>
    %124 = vector.broadcast %123 : vector<1x32xf32> to vector<8x32xf32>
    %125 = arith.addf %120, %124 : vector<8x32xf32>
    %126 = arith.addf %125, %79 : vector<8x32xf32>
    %c0_48 = arith.constant 0 : index
    %c0_49 = arith.constant 0 : index
    %c0_50 = arith.constant 0 : index
    %127 = vector.load %arg17[%c0_48, %c0_49, %c0_50] : memref<1x8x32xf32, #tpu.memory_space<vmem>>, vector<1x8x32xf32>
    %128 = vector.shape_cast %127 : vector<1x8x32xf32> to vector<8x32xf32>
    %129 = vector.shape_cast %126 : vector<8x32xf32> to vector<1x8x32xf32>
    tpu.vector_store %arg17[%c0_48, %c0_49, %c0_50], %129 {strides = array<i32>} : memref<1x8x32xf32, #tpu.memory_space<vmem>>, vector<1x8x32xf32>,
    return
  }
  func.func @transform_0(%arg0: i32, %arg1: i32) -> (i32, i32, i32) {
    %c0_i32 = arith.constant 0 : i32
    %c0_i32_0 = arith.constant 0 : i32
    %c0_i32_1 = arith.constant 0 : i32
    return %arg0, %c0_i32, %c0_i32_0 : i32, i32, i32
  }
  func.func @transform_1(%arg0: i32, %arg1: i32) -> (i32, i32) {
    %c0_i32 = arith.constant 0 : i32
    %c0_i32_0 = arith.constant 0 : i32
    %c0_i32_1 = arith.constant 0 : i32
    return %c0_i32, %c0_i32_0 : i32, i32
  }
  func.func @transform_2(%arg0: i32, %arg1: i32) -> (i32, i32) {
    %c0_i32 = arith.constant 0 : i32
    %c0_i32_0 = arith.constant 0 : i32
    %c0_i32_1 = arith.constant 0 : i32
    return %c0_i32, %c0_i32_0 : i32, i32
  }
  func.func @transform_3(%arg0: i32, %arg1: i32) -> (i32, i32) {
    %c0_i32 = arith.constant 0 : i32
    %c0_i32_0 = arith.constant 0 : i32
    %c0_i32_1 = arith.constant 0 : i32
    return %c0_i32, %c0_i32_0 : i32, i32
  }
  func.func @transform_4(%arg0: i32, %arg1: i32) -> (i32, i32) {
    %c0_i32 = arith.constant 0 : i32
    %c0_i32_0 = arith.constant 0 : i32
    %c0_i32_1 = arith.constant 0 : i32
    return %c0_i32, %c0_i32_0 : i32, i32
  }
  func.func @transform_5(%arg0: i32, %arg1: i32) -> (i32, i32) {
    %c0_i32 = arith.constant 0 : i32
    %c0_i32_0 = arith.constant 0 : i32
    %c0_i32_1 = arith.constant 0 : i32
    return %c0_i32, %c0_i32_0 : i32, i32
  }
  func.func @transform_6(%arg0: i32, %arg1: i32) -> (i32, i32) {
    %c0_i32 = arith.constant 0 : i32
    %c0_i32_0 = arith.constant 0 : i32
    %c0_i32_1 = arith.constant 0 : i32
    return %c0_i32, %c0_i32_0 : i32, i32
  }
  func.func @transform_7(%arg0: i32, %arg1: i32) -> (i32, i32) {
    %c0_i32 = arith.constant 0 : i32
    %c0_i32_0 = arith.constant 0 : i32
    %c0_i32_1 = arith.constant 0 : i32
    return %c0_i32, %c0_i32_0 : i32, i32
  }
  func.func @transform_8(%arg0: i32, %arg1: i32) -> (i32, i32) {
    %c0_i32 = arith.constant 0 : i32
    %c0_i32_0 = arith.constant 0 : i32
    %c0_i32_1 = arith.constant 0 : i32
    return %c0_i32, %c0_i32_0 : i32, i32
  }
  func.func @transform_9(%arg0: i32, %arg1: i32) -> (i32, i32) {
    %c0_i32 = arith.constant 0 : i32
    %c0_i32_0 = arith.constant 0 : i32
    %c0_i32_1 = arith.constant 0 : i32
    return %c0_i32, %c0_i32_0 : i32, i32
  }
  func.func @transform_10(%arg0: i32, %arg1: i32) -> (i32, i32) {
    %c0_i32 = arith.constant 0 : i32
    %c0_i32_0 = arith.constant 0 : i32
    %c0_i32_1 = arith.constant 0 : i32
    return %c0_i32, %c0_i32_0 : i32, i32
  }
  func.func @transform_11(%arg0: i32, %arg1: i32) -> (i32, i32) {
    %c0_i32 = arith.constant 0 : i32
    %c0_i32_0 = arith.constant 0 : i32
    %c0_i32_1 = arith.constant 0 : i32
    return %c0_i32, %c0_i32_0 : i32, i32
  }
  func.func @transform_12(%arg0: i32, %arg1: i32) -> (i32, i32) {
    %c0_i32 = arith.constant 0 : i32
    %c0_i32_0 = arith.constant 0 : i32
    %c0_i32_1 = arith.constant 0 : i32
    return %c0_i32, %c0_i32_0 : i32, i32
  }
  func.func @transform_13(%arg0: i32, %arg1: i32) -> (i32, i32) {
    %c0_i32 = arith.constant 0 : i32
    %c0_i32_0 = arith.constant 0 : i32
    %c0_i32_1 = arith.constant 0 : i32
    return %c0_i32, %c0_i32_0 : i32, i32
  }
  func.func @transform_14(%arg0: i32, %arg1: i32) -> (i32, i32) {
    %c0_i32 = arith.constant 0 : i32
    %c0_i32_0 = arith.constant 0 : i32
    %c0_i32_1 = arith.constant 0 : i32
    return %c0_i32, %c0_i32_0 : i32, i32
  }
  func.func @transform_15(%arg0: i32, %arg1: i32) -> (i32, i32, i32) {
    %c0_i32 = arith.constant 0 : i32
    %c0_i32_0 = arith.constant 0 : i32
    return %arg0, %arg1, %c0_i32 : i32, i32, i32
  }
}

</mosaic_0001>

<llo_original>
// kernel: tpu_custom_call.1
$region0: #{tpu_custom_call.1}
  #allocation0 [shape = 'u32[]', space=smem, size = 0x4, offset = 0x4, fixed_abs, tag = 'smem constant byte address 0x4 - core index']
  #allocation1 [shape = 'u32[144,128]{1,0:T(1,128)}', space=vmem, size = 0x12000, scoped, tag = 'internal scratch']
  #allocation2 [shape = 'bf16[8,32]{1,0:T(8,128)(2,1)}', space=vmem, size = 0x800, scoped, tag = 'scratch operand']
  #allocation3 [shape = 'bf16[8,32]{1,0:T(8,128)(2,1)}', space=vmem, size = 0x800, scoped, tag = 'scratch operand']
  %s0 = inlined_call_operand.vmem [shape: f32[2,8,32], index: 0, kind: input, shape index: {}]
  %s1 = inlined_call_operand.vmem [shape: f32[1,32], index: 1, kind: input, shape index: {}]
  %s2 = inlined_call_operand.vmem [shape: f32[1,32], index: 2, kind: input, shape index: {}]
  %s3 = inlined_call_operand.vmem [shape: bf16[32,32], index: 3, kind: input, shape index: {}]
  %s4 = inlined_call_operand.vmem [shape: bf16[32,32], index: 4, kind: input, shape index: {}]
  %s5 = inlined_call_operand.hbm [shape: bf16[32,32], index: 5, kind: input, shape index: {}]
  %s6 = inlined_call_operand.hbm [shape: bf16[32,32], index: 6, kind: input, shape index: {}]
  %s7 = inlined_call_operand.vmem [shape: f32[1,32], index: 7, kind: input, shape index: {}]
  %s8 = inlined_call_operand.vmem [shape: f32[1,32], index: 8, kind: input, shape index: {}]
  %s9 = inlined_call_operand.hbm [shape: bf16[32,64], index: 9, kind: input, shape index: {}]
  %s10 = inlined_call_operand.hbm [shape: f32[1,64], index: 10, kind: input, shape index: {}]
  %s11 = inlined_call_operand.vmem [shape: bf16[64,32], index: 11, kind: input, shape index: {}]
  %s12 = inlined_call_operand.vmem [shape: f32[1,32], index: 12, kind: input, shape index: {}]
  %s13 = inlined_call_operand.vmem [shape: f32[1,32], index: 13, kind: input, shape index: {}]
  %s14 = inlined_call_operand.vmem [shape: f32[1,32], index: 14, kind: input, shape index: {}]
  %s15 = inlined_call_operand.hbm [shape: f32[2,8,32], index: 15, kind: output, shape index: {}]
  %s16 = sld [smem:[#allocation0]]
  $region113: #{tpu_custom_call.1} parent=0
    _
  %s18 = ssub.s32 1, %s16
  %s19 = scalar_select 0, %s18, %s16
  $region1: #{tpu_custom_call.1} parent=0
    #allocation4 [shape = 'u8[8192]{0}', space=vmem, size = 0x2000, scoped, tag = 'input window, operand 5, single buffered']
    #allocation5 [shape = 's32[2]{0}', space=sflag, size = 0x8, scoped, tag = 'scoped memory for tpu_custom_call.1']
    #allocation6 [shape = 's32[2]{0}', space=sflag, size = 0x8, scoped, tag = 'scoped memory for tpu_custom_call.1']
    #allocation7 [shape = 'u8[8192]{0}', space=vmem, size = 0x2000, scoped, tag = 'input window, operand 6, single buffered']
    #allocation8 [shape = 's32[1]{0}', space=sflag, size = 0x4, scoped, tag = 'scoped memory for tpu_custom_call.1']
    #allocation9 [shape = 'u8[8192]{0}', space=vmem, size = 0x2000, scoped, tag = 'input window, operand 9, single buffered']
    #allocation10 [shape = 'u8[512]{0}', space=vmem, size = 0x400, scoped, tag = 'input window, operand 10, single buffered']
    #allocation11 [shape = 's32[1]{0}', space=sflag, size = 0x4, scoped, tag = 'scoped memory for tpu_custom_call.1']
    #allocation12 [shape = 'u8[8192]{0}', space=vmem, size = 0x2000, scoped, tag = 'output window, operand 0']
    %20 = vsyncpa [#allocation5], 0
    %21 = vsyncpa [#allocation8], 0
    %22 = vsyncpa [#allocation11], 0
    %23 = vsyncpa [#allocation6], 0
    %s24 = scalar_lea.sflag [#allocation6], 1
    %25 = vsyncpa %s24, 0
    loop: start=0, step=1, limit=4
    $region2: #{tpu_custom_call.1} parent=1 // loop_pre_header
      _
    $region3: #{tpu_custom_call.1} parent=1 // loop_header
      %s27 = sphi 0, %s31
      %p28 = scmp.ge.s32.totalorder %s27, 4
      %s34 = sphi 0, %s46
      %s35 = sphi 0, %s42
      %s36 = sphi 0, %s34
      %s37 = sphi 0, %s35
      %s38 = sphi 0, %s36
      %s39 = sphi 0, %s37
      %s49 = sphi 0, %s51
      %s52 = sphi 0, %s49
      %s53 = sphi 0, %s52
      %s69 = sphi 0, %s53
      %s73 = sphi 0, %s73
      %s75 = sphi 0, %s73
      %s76 = sphi 0, %s75
      %s90 = sphi 0, %s76
      %s94 = sphi 0, %s94
      %s96 = sphi 0, %s94
      %s97 = sphi 0, %s96
      %s111 = sphi 0, %s97
      %s115 = sphi 0, %s115
      %s117 = sphi 0, %s115
      %s118 = sphi 0, %s117
      %s132 = sphi 0, %s118
      %s136 = sphi 0, %s136
      %s138 = sphi 0, %s136
      %s139 = sphi 0, %s138
      %s153 = sphi 0, %s139
      %s157 = sphi 0, %s157
      %s159 = sphi 0, %s157
      %s160 = sphi 0, %s159
      %s174 = sphi 0, %s160
      %s178 = sphi 0, %s178
      %s180 = sphi 0, %s178
      %s181 = sphi 0, %s180
      %s195 = sphi 0, %s181
      %s199 = sphi 0, %s199
      %s201 = sphi 0, %s199
      %s202 = sphi 0, %s201
      %s216 = sphi 0, %s202
      %s220 = sphi 0, %s220
      %s222 = sphi 0, %s220
      %s223 = sphi 0, %s222
      %s237 = sphi 0, %s223
      %s241 = sphi 0, %s241
      %s243 = sphi 0, %s241
      %s244 = sphi 0, %s243
      %s258 = sphi 0, %s244
      %s262 = sphi 0, %s262
      %s264 = sphi 0, %s262
      %s265 = sphi 0, %s264
      %s279 = sphi 0, %s265
      %s283 = sphi 0, %s283
      %s285 = sphi 0, %s283
      %s286 = sphi 0, %s285
      %s300 = sphi 0, %s286
      %s304 = sphi 0, %s304
      %s306 = sphi 0, %s304
      %s307 = sphi 0, %s306
      %s321 = sphi 0, %s307
      %s325 = sphi 0, %s325
      %s327 = sphi 0, %s325
      %s328 = sphi 0, %s327
      %s342 = sphi 0, %s328
      %s346 = sphi 0, %s346
      %s348 = sphi 0, %s346
      %s349 = sphi 0, %s348
      %s363 = sphi 0, %s349
      %s371 = sphi 0, %s373
      %s374 = sphi 0, %s371
      %s375 = sphi 0, %s374
      %s391 = sphi 0, %s375
    $region4: #{tpu_custom_call.1} parent=1 // loop_header_branch
      %30 = sbr.rel (%p28) target = $region8
    $region5: #{tpu_custom_call.1} parent=1 // loop_body
      %s32 = ssub.s32 %s27, 1
      %s33 = ssub.s32 %s27, 2
      %s40 = sadd.s32 1, %s35
      %p41 = scmp.ge.s32.totalorder %s40, 1
      %s42 = scalar_select %p41, 0, %s40
      %s43 = sadd.s32 1, %s34
      %s44 = scalar_select %p41, %s43, %s34
      %p45 = scmp.ge.s32.totalorder %s44, 2
      %s46 = scalar_select %p45, 0, %s44
      %s47 = ssub.s32 %s34, %s46
      %p48 = scmp.eq.s32.totalorder %s47, 0
      %s50 = sadd.s32 %s49, 1
      %s51 = scalar_select %p48, %s49, %s50
      %p54 = pneg %p48
      %p55 = scmp.eq.s32.totalorder %s27, 1
      %p56 = por %p54, %p55
      %p57 = scmp.ne.s32.totalorder %s49, %s52
      %p58 = scmp.eq.s32.totalorder %s27, 0
      %p59 = por %p57, %p58
      %p60 = scmp.ne.s32.totalorder %s49, %s52
      %p61 = scmp.eq.s32.totalorder %s32, 1
      %p62 = por %p60, %p61
      %p63 = scmp.ne.s32.totalorder %s52, %s53
      %p64 = scmp.eq.s32.totalorder %s32, 0
      %p65 = por %p63, %p64
      %p66 = scmp.ne.s32.totalorder %s52, %s53
      %p67 = scmp.eq.s32.totalorder %s33, 1
      %p68 = por %p66, %p67
      %p70 = scmp.ne.s32.totalorder %s53, %s69
      %p71 = scmp.eq.s32.totalorder %s33, 0
      %p72 = por %p70, %p71
      %s74 = sadd.s32 %s73, 1
      %p77 = scmp.eq.s32.totalorder %s27, 1
      %p78 = scmp.ne.s32.totalorder %s73, %s75
      %p79 = scmp.eq.s32.totalorder %s27, 0
      %p80 = por %p78, %p79
      %p81 = scmp.ne.s32.totalorder %s73, %s75
      %p82 = scmp.eq.s32.totalorder %s32, 1
      %p83 = por %p81, %p82
      %p84 = scmp.ne.s32.totalorder %s75, %s76
      %p85 = scmp.eq.s32.totalorder %s32, 0
      %p86 = por %p84, %p85
      %p87 = scmp.ne.s32.totalorder %s75, %s76
      %p88 = scmp.eq.s32.totalorder %s33, 1
      %p89 = por %p87, %p88
      %p91 = scmp.ne.s32.totalorder %s76, %s90
      %p92 = scmp.eq.s32.totalorder %s33, 0
      %p93 = por %p91, %p92
      %s95 = sadd.s32 %s94, 1
      %p98 = scmp.eq.s32.totalorder %s27, 1
      %p99 = scmp.ne.s32.totalorder %s94, %s96
      %p100 = scmp.eq.s32.totalorder %s27, 0
      %p101 = por %p99, %p100
      %p102 = scmp.ne.s32.totalorder %s94, %s96
      %p103 = scmp.eq.s32.totalorder %s32, 1
      %p104 = por %p102, %p103
      %p105 = scmp.ne.s32.totalorder %s96, %s97
      %p106 = scmp.eq.s32.totalorder %s32, 0
      %p107 = por %p105, %p106
      %p108 = scmp.ne.s32.totalorder %s96, %s97
      %p109 = scmp.eq.s32.totalorder %s33, 1
      %p110 = por %p108, %p109
      %p112 = scmp.ne.s32.totalorder %s97, %s111
      %p113 = scmp.eq.s32.totalorder %s33, 0
      %p114 = por %p112, %p113
      %s116 = sadd.s32 %s115, 1
      %p119 = scmp.eq.s32.totalorder %s27, 1
      %p120 = scmp.ne.s32.totalorder %s115, %s117
      %p121 = scmp.eq.s32.totalorder %s27, 0
      %p122 = por %p120, %p121
      %p123 = scmp.ne.s32.totalorder %s115, %s117
      %p124 = scmp.eq.s32.totalorder %s32, 1
      %p125 = por %p123, %p124
      %p126 = scmp.ne.s32.totalorder %s117, %s118
      %p127 = scmp.eq.s32.totalorder %s32, 0
      %p128 = por %p126, %p127
      %p129 = scmp.ne.s32.totalorder %s117, %s118
      %p130 = scmp.eq.s32.totalorder %s33, 1
      %p131 = por %p129, %p130
      %p133 = scmp.ne.s32.totalorder %s118, %s132
      %p134 = scmp.eq.s32.totalorder %s33, 0
      %p135 = por %p133, %p134
      %s137 = sadd.s32 %s136, 1
      %p140 = scmp.eq.s32.totalorder %s27, 1
      %p141 = scmp.ne.s32.totalorder %s136, %s138
      %p142 = scmp.eq.s32.totalorder %s27, 0
      %p143 = por %p141, %p142
      %p144 = scmp.ne.s32.totalorder %s136, %s138
      %p145 = scmp.eq.s32.totalorder %s32, 1
      %p146 = por %p144, %p145
      %p147 = scmp.ne.s32.totalorder %s138, %s139
      %p148 = scmp.eq.s32.totalorder %s32, 0
      %p149 = por %p147, %p148
      %p150 = scmp.ne.s32.totalorder %s138, %s139
      %p151 = scmp.eq.s32.totalorder %s33, 1
      %p152 = por %p150, %p151
      %p154 = scmp.ne.s32.totalorder %s139, %s153
      %p155 = scmp.eq.s32.totalorder %s33, 0
      %p156 = por %p154, %p155
      %s158 = sadd.s32 %s157, 1
      %p161 = scmp.eq.s32.totalorder %s27, 1
      %p162 = scmp.ne.s32.totalorder %s157, %s159
      %p163 = scmp.eq.s32.totalorder %s27, 0
      %p164 = por %p162, %p163
      %p165 = scmp.ne.s32.totalorder %s157, %s159
      %p166 = scmp.eq.s32.totalorder %s32, 1
      %p167 = por %p165, %p166
      %p168 = scmp.ne.s32.totalorder %s159, %s160
      %p169 = scmp.eq.s32.totalorder %s32, 0
      %p170 = por %p168, %p169
      %p171 = scmp.ne.s32.totalorder %s159, %s160
      %p172 = scmp.eq.s32.totalorder %s33, 1
      %p173 = por %p171, %p172
      %p175 = scmp.ne.s32.totalorder %s160, %s174
      %p176 = scmp.eq.s32.totalorder %s33, 0
      %p177 = por %p175, %p176
      %s179 = sadd.s32 %s178, 1
      %p182 = scmp.eq.s32.totalorder %s27, 1
      %p183 = scmp.ne.s32.totalorder %s178, %s180
      %p184 = scmp.eq.s32.totalorder %s27, 0
      %p185 = por %p183, %p184
      %p186 = scmp.ne.s32.totalorder %s178, %s180
      %p187 = scmp.eq.s32.totalorder %s32, 1
      %p188 = por %p186, %p187
      %p189 = scmp.ne.s32.totalorder %s180, %s181
      %p190 = scmp.eq.s32.totalorder %s32, 0
      %p191 = por %p189, %p190
      %p192 = scmp.ne.s32.totalorder %s180, %s181
      %p193 = scmp.eq.s32.totalorder %s33, 1
      %p194 = por %p192, %p193
      %p196 = scmp.ne.s32.totalorder %s181, %s195
      %p197 = scmp.eq.s32.totalorder %s33, 0
      %p198 = por %p196, %p197
      %s200 = sadd.s32 %s199, 1
      %p203 = scmp.eq.s32.totalorder %s27, 1
      %p204 = scmp.ne.s32.totalorder %s199, %s201
      %p205 = scmp.eq.s32.totalorder %s27, 0
      %p206 = por %p204, %p205
      %p207 = scmp.ne.s32.totalorder %s199, %s201
      %p208 = scmp.eq.s32.totalorder %s32, 1
      %p209 = por %p207, %p208
      %p210 = scmp.ne.s32.totalorder %s201, %s202
      %p211 = scmp.eq.s32.totalorder %s32, 0
      %p212 = por %p210, %p211
      %p213 = scmp.ne.s32.totalorder %s201, %s202
      %p214 = scmp.eq.s32.totalorder %s33, 1
      %p215 = por %p213, %p214
      %p217 = scmp.ne.s32.totalorder %s202, %s216
      %p218 = scmp.eq.s32.totalorder %s33, 0
      %p219 = por %p217, %p218
      %s221 = sadd.s32 %s220, 1
      %p224 = scmp.eq.s32.totalorder %s27, 1
      %p225 = scmp.ne.s32.totalorder %s220, %s222
      %p226 = scmp.eq.s32.totalorder %s27, 0
      %p227 = por %p225, %p226
      %p228 = scmp.ne.s32.totalorder %s220, %s222
      %p229 = scmp.eq.s32.totalorder %s32, 1
      %p230 = por %p228, %p229
      %p231 = scmp.ne.s32.totalorder %s222, %s223
      %p232 = scmp.eq.s32.totalorder %s32, 0
      %p233 = por %p231, %p232
      %p234 = scmp.ne.s32.totalorder %s222, %s223
      %p235 = scmp.eq.s32.totalorder %s33, 1
      %p236 = por %p234, %p235
      %p238 = scmp.ne.s32.totalorder %s223, %s237
      %p239 = scmp.eq.s32.totalorder %s33, 0
      %p240 = por %p238, %p239
      %s242 = sadd.s32 %s241, 1
      %p245 = scmp.eq.s32.totalorder %s27, 1
      %p246 = scmp.ne.s32.totalorder %s241, %s243
      %p247 = scmp.eq.s32.totalorder %s27, 0
      %p248 = por %p246, %p247
      %p249 = scmp.ne.s32.totalorder %s241, %s243
      %p250 = scmp.eq.s32.totalorder %s32, 1
      %p251 = por %p249, %p250
      %p252 = scmp.ne.s32.totalorder %s243, %s244
      %p253 = scmp.eq.s32.totalorder %s32, 0
      %p254 = por %p252, %p253
      %p255 = scmp.ne.s32.totalorder %s243, %s244
      %p256 = scmp.eq.s32.totalorder %s33, 1
      %p257 = por %p255, %p256
      %p259 = scmp.ne.s32.totalorder %s244, %s258
      %p260 = scmp.eq.s32.totalorder %s33, 0
      %p261 = por %p259, %p260
      %s263 = sadd.s32 %s262, 1
      %p266 = scmp.eq.s32.totalorder %s27, 1
      %p267 = scmp.ne.s32.totalorder %s262, %s264
      %p268 = scmp.eq.s32.totalorder %s27, 0
      %p269 = por %p267, %p268
      %p270 = scmp.ne.s32.totalorder %s262, %s264
      %p271 = scmp.eq.s32.totalorder %s32, 1
      %p272 = por %p270, %p271
      %p273 = scmp.ne.s32.totalorder %s264, %s265
      %p274 = scmp.eq.s32.totalorder %s32, 0
      %p275 = por %p273, %p274
      %p276 = scmp.ne.s32.totalorder %s264, %s265
      %p277 = scmp.eq.s32.totalorder %s33, 1
      %p278 = por %p276, %p277
      %p280 = scmp.ne.s32.totalorder %s265, %s279
      %p281 = scmp.eq.s32.totalorder %s33, 0
      %p282 = por %p280, %p281
      %s284 = sadd.s32 %s283, 1
      %p287 = scmp.eq.s32.totalorder %s27, 1
      %p288 = scmp.ne.s32.totalorder %s283, %s285
      %p289 = scmp.eq.s32.totalorder %s27, 0
      %p290 = por %p288, %p289
      %p291 = scmp.ne.s32.totalorder %s283, %s285
      %p292 = scmp.eq.s32.totalorder %s32, 1
      %p293 = por %p291, %p292
      %p294 = scmp.ne.s32.totalorder %s285, %s286
      %p295 = scmp.eq.s32.totalorder %s32, 0
      %p296 = por %p294, %p295
      %p297 = scmp.ne.s32.totalorder %s285, %s286
      %p298 = scmp.eq.s32.totalorder %s33, 1
      %p299 = por %p297, %p298
      %p301 = scmp.ne.s32.totalorder %s286, %s300
      %p302 = scmp.eq.s32.totalorder %s33, 0
      %p303 = por %p301, %p302
      %s305 = sadd.s32 %s304, 1
      %p308 = scmp.eq.s32.totalorder %s27, 1
      %p309 = scmp.ne.s32.totalorder %s304, %s306
      %p310 = scmp.eq.s32.totalorder %s27, 0
      %p311 = por %p309, %p310
      %p312 = scmp.ne.s32.totalorder %s304, %s306
      %p313 = scmp.eq.s32.totalorder %s32, 1
      %p314 = por %p312, %p313
      %p315 = scmp.ne.s32.totalorder %s306, %s307
      %p316 = scmp.eq.s32.totalorder %s32, 0
      %p317 = por %p315, %p316
      %p318 = scmp.ne.s32.totalorder %s306, %s307
      %p319 = scmp.eq.s32.totalorder %s33, 1
      %p320 = por %p318, %p319
      %p322 = scmp.ne.s32.totalorder %s307, %s321
      %p323 = scmp.eq.s32.totalorder %s33, 0
      %p324 = por %p322, %p323
      %s326 = sadd.s32 %s325, 1
      %p329 = scmp.eq.s32.totalorder %s27, 1
      %p330 = scmp.ne.s32.totalorder %s325, %s327
      %p331 = scmp.eq.s32.totalorder %s27, 0
      %p332 = por %p330, %p331
      %p333 = scmp.ne.s32.totalorder %s325, %s327
      %p334 = scmp.eq.s32.totalorder %s32, 1
      %p335 = por %p333, %p334
      %p336 = scmp.ne.s32.totalorder %s327, %s328
      %p337 = scmp.eq.s32.totalorder %s32, 0
      %p338 = por %p336, %p337
      %p339 = scmp.ne.s32.totalorder %s327, %s328
      %p340 = scmp.eq.s32.totalorder %s33, 1
      %p341 = por %p339, %p340
      %p343 = scmp.ne.s32.totalorder %s328, %s342
      %p344 = scmp.eq.s32.totalorder %s33, 0
      %p345 = por %p343, %p344
      %s347 = sadd.s32 %s346, 1
      %p350 = scmp.eq.s32.totalorder %s27, 1
      %p351 = scmp.ne.s32.totalorder %s346, %s348
      %p352 = scmp.eq.s32.totalorder %s27, 0
      %p353 = por %p351, %p352
      %p354 = scmp.ne.s32.totalorder %s346, %s348
      %p355 = scmp.eq.s32.totalorder %s32, 1
      %p356 = por %p354, %p355
      %p357 = scmp.ne.s32.totalorder %s348, %s349
      %p358 = scmp.eq.s32.totalorder %s32, 0
      %p359 = por %p357, %p358
      %p360 = scmp.ne.s32.totalorder %s348, %s349
      %p361 = scmp.eq.s32.totalorder %s33, 1
      %p362 = por %p360, %p361
      %p364 = scmp.ne.s32.totalorder %s349, %s363
      %p365 = scmp.eq.s32.totalorder %s33, 0
      %p366 = por %p364, %p365
      %s367 = ssub.s32 %s34, %s46
      %s368 = ssub.s32 %s35, %s42
      %s369 = sor.u32 %s367, %s368
      %p370 = scmp.eq.s32.totalorder %s369, 0
      %s372 = sadd.s32 %s371, 1
      %s373 = scalar_select %p370, %s371, %s372
      %p376 = pneg %p370
      %p377 = scmp.eq.s32.totalorder %s27, 1
      %p378 = por %p376, %p377
      %p379 = scmp.ne.s32.totalorder %s371, %s374
      %p380 = scmp.eq.s32.totalorder %s27, 0
      %p381 = por %p379, %p380
      %p382 = scmp.ne.s32.totalorder %s371, %s374
      %p383 = scmp.eq.s32.totalorder %s32, 1
      %p384 = por %p382, %p383
      %p385 = scmp.ne.s32.totalorder %s374, %s375
      %p386 = scmp.eq.s32.totalorder %s32, 0
      %p387 = por %p385, %p386
      %p388 = scmp.ne.s32.totalorder %s374, %s375
      %p389 = scmp.eq.s32.totalorder %s33, 1
      %p390 = por %p388, %p389
      %p392 = scmp.ne.s32.totalorder %s375, %s391
      %p393 = scmp.eq.s32.totalorder %s33, 0
      %p394 = por %p392, %p393
      %p395 = scmp.le.s32.totalorder 1, %s27
      %p396 = scmp.lt.s32.totalorder %s27, 3
      %p397 = pnand %p395, %p396
      %p398 = pneg %p397
      // Predicated region
      $region9: #{tpu_custom_call.1} parent=5 // pred_check
        _
      $region10: #{tpu_custom_call.1} parent=5 // pred_check_branch
        %400 = sbr.rel (%p397) target = $region12
      $region11: #{tpu_custom_call.1} parent=5 // pred_region
        %s401 = ssub.s32 %s27, 1
        // Predicated region
        $region13: #{tpu_custom_call.1} parent=11 // pred_check
          %p402 = pneg %p86
        $region14: #{tpu_custom_call.1} parent=11 // pred_check_branch
          %404 = sbr.rel (%p402) target = $region16
        $region15: #{tpu_custom_call.1} parent=11 // pred_region
          _
        $region16: #{tpu_custom_call.1} parent=11 // pred_fallthru
          _
        // Predicated region
        $region17: #{tpu_custom_call.1} parent=11 // pred_check
          %p405 = pneg %p107
        $region18: #{tpu_custom_call.1} parent=11 // pred_check_branch
          %407 = sbr.rel (%p405) target = $region20
        $region19: #{tpu_custom_call.1} parent=11 // pred_region
          _
        $region20: #{tpu_custom_call.1} parent=11 // pred_fallthru
          _
        // Predicated region
        $region21: #{tpu_custom_call.1} parent=11 // pred_check
          %p408 = pneg %p128
        $region22: #{tpu_custom_call.1} parent=11 // pred_check_branch
          %410 = sbr.rel (%p408) target = $region24
        $region23: #{tpu_custom_call.1} parent=11 // pred_region
          _
        $region24: #{tpu_custom_call.1} parent=11 // pred_fallthru
          _
        // Predicated region
        $region25: #{tpu_custom_call.1} parent=11 // pred_check
          %p411 = pneg %p149
        $region26: #{tpu_custom_call.1} parent=11 // pred_check_branch
          %413 = sbr.rel (%p411) target = $region28
        $region27: #{tpu_custom_call.1} parent=11 // pred_region
          _
        $region28: #{tpu_custom_call.1} parent=11 // pred_fallthru
          _
        // Predicated region
        $region29: #{tpu_custom_call.1} parent=11 // pred_check
          %p414 = pneg %p170
        $region30: #{tpu_custom_call.1} parent=11 // pred_check_branch
          %416 = sbr.rel (%p414) target = $region32
        $region31: #{tpu_custom_call.1} parent=11 // pred_region
          %s418 = ssub.s32 256, 256
          %419 = vsyncadd [#allocation5], %s418
          %s420 = sshll.u32 [#allocation4], 4
          %s421 = int_to_ptr.vmem [resolvable:$true] %s420
          %426 = dma.hbm_to_vmem [thread:$0]  %s5, 256, %s421, [#allocation5], 64, 64, 4
        $region32: #{tpu_custom_call.1} parent=11 // pred_fallthru
          _
        // Predicated region
        $region33: #{tpu_custom_call.1} parent=11 // pred_check
          %p427 = pneg %p191
        $region34: #{tpu_custom_call.1} parent=11 // pred_check_branch
          %429 = sbr.rel (%p427) target = $region36
        $region35: #{tpu_custom_call.1} parent=11 // pred_region
          %s431 = ssub.s32 256, 256
          %432 = vsyncadd [#allocation8], %s431
          %s433 = sshll.u32 [#allocation7], 4
          %s434 = int_to_ptr.vmem [resolvable:$true] %s433
          %439 = dma.hbm_to_vmem [thread:$0]  %s6, 256, %s434, [#allocation8], 64, 64, 4
        $region36: #{tpu_custom_call.1} parent=11 // pred_fallthru
          _
        // Predicated region
        $region37: #{tpu_custom_call.1} parent=11 // pred_check
          %p440 = pneg %p212
        $region38: #{tpu_custom_call.1} parent=11 // pred_check_branch
          %442 = sbr.rel (%p440) target = $region40
        $region39: #{tpu_custom_call.1} parent=11 // pred_region
          _
        $region40: #{tpu_custom_call.1} parent=11 // pred_fallthru
          _
        // Predicated region
        $region41: #{tpu_custom_call.1} parent=11 // pred_check
          %p443 = pneg %p233
        $region42: #{tpu_custom_call.1} parent=11 // pred_check_branch
          %445 = sbr.rel (%p443) target = $region44
        $region43: #{tpu_custom_call.1} parent=11 // pred_region
          _
        $region44: #{tpu_custom_call.1} parent=11 // pred_fallthru
          _
        // Predicated region
        $region45: #{tpu_custom_call.1} parent=11 // pred_check
          %p446 = pneg %p254
        $region46: #{tpu_custom_call.1} parent=11 // pred_check_branch
          %448 = sbr.rel (%p446) target = $region48
        $region47: #{tpu_custom_call.1} parent=11 // pred_region
          %s450 = ssub.s32 256, 256
          %451 = vsyncadd [#allocation8], %s450
          %s452 = sshll.u32 [#allocation9], 4
          %s453 = int_to_ptr.vmem [resolvable:$true] %s452
          %458 = dma.hbm_to_vmem [thread:$0]  %s9, 256, %s453, [#allocation8], 64, 64, 4
        $region48: #{tpu_custom_call.1} parent=11 // pred_fallthru
          _
        // Predicated region
        $region49: #{tpu_custom_call.1} parent=11 // pred_check
          %p459 = pneg %p275
        $region50: #{tpu_custom_call.1} parent=11 // pred_check_branch
          %461 = sbr.rel (%p459) target = $region52
        $region51: #{tpu_custom_call.1} parent=11 // pred_region
          %s463 = ssub.s32 16, 16
          %464 = vsyncadd [#allocation11], %s463
          %s466 = sshll.u32 [#allocation10], 4
          %s467 = int_to_ptr.vmem [resolvable:$true] %s466
          %469 = dma.hbm_to_vmem [thread:$0]  %s10, 16, %s467, [#allocation11]
        $region52: #{tpu_custom_call.1} parent=11 // pred_fallthru
          _
        // Predicated region
        $region53: #{tpu_custom_call.1} parent=11 // pred_check
          %p470 = pneg %p296
        $region54: #{tpu_custom_call.1} parent=11 // pred_check_branch
          %472 = sbr.rel (%p470) target = $region56
        $region55: #{tpu_custom_call.1} parent=11 // pred_region
          _
        $region56: #{tpu_custom_call.1} parent=11 // pred_fallthru
          _
        // Predicated region
        $region57: #{tpu_custom_call.1} parent=11 // pred_check
          %p473 = pneg %p317
        $region58: #{tpu_custom_call.1} parent=11 // pred_check_branch
          %475 = sbr.rel (%p473) target = $region60
        $region59: #{tpu_custom_call.1} parent=11 // pred_region
          _
        $region60: #{tpu_custom_call.1} parent=11 // pred_fallthru
          _
        // Predicated region
        $region61: #{tpu_custom_call.1} parent=11 // pred_check
          %p476 = pneg %p338
        $region62: #{tpu_custom_call.1} parent=11 // pred_check_branch
          %478 = sbr.rel (%p476) target = $region64
        $region63: #{tpu_custom_call.1} parent=11 // pred_region
          _
        $region64: #{tpu_custom_call.1} parent=11 // pred_fallthru
          _
        // Predicated region
        $region65: #{tpu_custom_call.1} parent=11 // pred_check
          %p479 = pneg %p359
        $region66: #{tpu_custom_call.1} parent=11 // pred_check_branch
          %481 = sbr.rel (%p479) target = $region68
        $region67: #{tpu_custom_call.1} parent=11 // pred_region
          _
        $region68: #{tpu_custom_call.1} parent=11 // pred_fallthru
          _
      $region12: #{tpu_custom_call.1} parent=5 // pred_fallthru
        _
      %p482 = scmp.lt.s32.totalorder %s27, 2
      // Predicated region
      $region69: #{tpu_custom_call.1} parent=5 // pred_check
        %p483 = pneg %p482
      $region70: #{tpu_custom_call.1} parent=5 // pred_check_branch
        %485 = sbr.rel (%p483) target = $region72
      $region71: #{tpu_custom_call.1} parent=5 // pred_region
        // Predicated region
        $region73: #{tpu_custom_call.1} parent=71 // pred_check
          %p486 = pneg %p59
        $region74: #{tpu_custom_call.1} parent=71 // pred_check_branch
          %488 = sbr.rel (%p486) target = $region76
        $region75: #{tpu_custom_call.1} parent=71 // pred_region
          %p489 = scmp.lt.s32.totalorder %s34, 1
          %s490 = scalar_select %p489, %s34, 1
          %s491 = smul.addr %s490, 8
          %s492 = scalar_lea.vmem %s0, %s491
        $region76: #{tpu_custom_call.1} parent=71 // pred_fallthru
          _
      $region72: #{tpu_custom_call.1} parent=5 // pred_fallthru
        _
      %p493 = scmp.le.s32.totalorder 1, %s27
      %p494 = scmp.lt.s32.totalorder %s27, 3
      %p495 = pnand %p493, %p494
      %p496 = pneg %p495
      // Predicated region
      $region77: #{tpu_custom_call.1} parent=5 // pred_check
        _
      $region78: #{tpu_custom_call.1} parent=5 // pred_check_branch
        %498 = sbr.rel (%p495) target = $region80
      $region79: #{tpu_custom_call.1} parent=5 // pred_region
        %s499 = ssub.s32 %s27, 1
        // Predicated region
        $region81: #{tpu_custom_call.1} parent=79 // pred_check
          %p500 = pneg %p170
        $region82: #{tpu_custom_call.1} parent=79 // pred_check_branch
          %502 = sbr.rel (%p500) target = $region84
        $region83: #{tpu_custom_call.1} parent=79 // pred_region
          %503 = dma.done [#allocation5], 256
        $region84: #{tpu_custom_call.1} parent=79 // pred_fallthru
          _
        // Predicated region
        $region85: #{tpu_custom_call.1} parent=79 // pred_check
          %p504 = pneg %p191
        $region86: #{tpu_custom_call.1} parent=79 // pred_check_branch
          %506 = sbr.rel (%p504) target = $region88
        $region87: #{tpu_custom_call.1} parent=79 // pred_region
          %507 = dma.done [#allocation8], 256
        $region88: #{tpu_custom_call.1} parent=79 // pred_fallthru
          _
        // Predicated region
        $region89: #{tpu_custom_call.1} parent=79 // pred_check
          %p508 = pneg %p254
        $region90: #{tpu_custom_call.1} parent=79 // pred_check_branch
          %510 = sbr.rel (%p508) target = $region92
        $region91: #{tpu_custom_call.1} parent=79 // pred_region
          %511 = dma.done [#allocation8], 256
        $region92: #{tpu_custom_call.1} parent=79 // pred_fallthru
          _
        // Predicated region
        $region93: #{tpu_custom_call.1} parent=79 // pred_check
          %p512 = pneg %p275
        $region94: #{tpu_custom_call.1} parent=79 // pred_check_branch
          %514 = sbr.rel (%p512) target = $region96
        $region95: #{tpu_custom_call.1} parent=79 // pred_region
          %515 = dma.done [#allocation11], 16
        $region96: #{tpu_custom_call.1} parent=79 // pred_fallthru
          _
        %p516 = scmp.lt.s32.totalorder %s36, 1
        %s517 = scalar_select %p516, %s36, 1
        %s518 = smul.addr %s517, 8
        %s519 = scalar_lea.vmem %s0, %s518
        %p520 = pneg %p65
        %p521 = pneg %p62
        %p522 = pneg %p86
        %p523 = pneg %p83
        %p524 = pneg %p107
        %p525 = pneg %p104
        %p526 = pneg %p128
        %p527 = pneg %p125
        %p528 = pneg %p149
        %p529 = pneg %p146
        %p530 = pneg %p170
        %p531 = pneg %p167
        %p532 = pneg %p191
        %p533 = pneg %p188
        %p534 = pneg %p212
        %p535 = pneg %p209
        %p536 = pneg %p233
        %p537 = pneg %p230
        %p538 = pneg %p254
        %p539 = pneg %p251
        %p540 = pneg %p275
        %p541 = pneg %p272
        %p542 = pneg %p296
        %p543 = pneg %p293
        %p544 = pneg %p317
        %p545 = pneg %p314
        %p546 = pneg %p338
        %p547 = pneg %p335
        %p548 = pneg %p359
        %p549 = pneg %p356
        %p550 = pneg %p387
        %p551 = pneg %p384
        %s552 = sand.u32 %s374, 1
        %s553 = scalar_lea.sflag [#allocation6], %s552
        %s554 = sand.u32 %s374, 1
        %s555 = smul.addr %s554, 8
        %s556 = scalar_lea.vmem [#allocation12], %s555
        %p557 = scmp.lt.s32.totalorder %s36, 1
        %s558 = scalar_select %p557, %s36, 1
        %s559 = smul.addr %s558, 8
        %s560 = scalar_lea.vmem %s0, %s559
        %p562 = scmp.eq.s32.totalorder %s37, 0
        // Predicated region
        $region97: #{tpu_custom_call.1} parent=79 // pred_check
          %p563 = pneg %p562
        $region98: #{tpu_custom_call.1} parent=79 // pred_check_branch
          %565 = sbr.rel (%p563) target = $region100
        $region99: #{tpu_custom_call.1} parent=79 // pred_region
          %v566 = vld [vmem:[%s560] sm:$0xff]
          %v567 = vld [vmem:[%s1] sm:$0x1]
          %v568 = vld [vmem:[%s2] sm:$0x1]
          %vm569 = vcmask 261120
          %v570 = vsel %vm569, %v566, 0.0
          %571 = vadd.xlane.f32.xlu0 %v570
          %v572 = vpop.xlane.xlu0 %571
          %v573 = vrcp.pop 32.0
          %v574 = vmul.f32 %v572, %v573
          %v575 = vsub.f32 %v566, %v574
          %v576 = vmul.f32 %v575, %v575
          %v577 = vsel %vm569, %v576, 0.0
          %578 = vadd.xlane.f32.xlu0 %v577
          %v579 = vpop.xlane.xlu0 %578
          %v580 = vmul.f32 %v579, %v573
          %v581 = vadd.f32 %v580, 1e-05
          %v582 = vrsqrt.pop %v581
          %v583 = vmul.f32 %v575, %v582
          %v585 = vlaneseq
          %v586 = vshrl.u32 %v585, 7
          %v587 = vsub.s32 0, %v586
          %v588 = vrot.slane %v567, %v587
          %v590 = vmul.f32 %v583, %v588
          %v592 = vlaneseq
          %v593 = vshrl.u32 %v592, 7
          %v594 = vsub.s32 0, %v593
          %v595 = vrot.slane %v568, %v594
          %v597 = vadd.f32 %v590, %v595
          %v598 = vpack.c.bf16 %v597, %v597
          %v599 = vld [vmem:[%s4] sm:$0xf]
          %v600 = vld [vmem:[%s4 + $0x4] sm:$0xf]
          %v601 = vld [vmem:[%s4 + $0x8] sm:$0xf]
          %v602 = vld [vmem:[%s4 + $0xc] sm:$0xf]
          %v607 = vunpack.c.l.b16 %v599
          %v608 = vunpack.c.l.b16 %v600
          %v609 = vunpack.c.l.b16 %v601
          %v610 = vunpack.c.l.b16 %v602
          %v611 = vpack.c.b16 %v608, %v607
          %v612 = vpack.c.b16 %v610, %v609
          %v616 = vsel %vm569, %v598, 0
          %618 = vmatprep.subr.bf16.mxu0 0
          %619 = vmatpush1.bf16.msra.mxu0 0
          %620 = vmatprep.subr.bf16.mxu0 0
          %621 = vmatpush1.bf16.msra.mxu0 0
          %622 = vmatprep.subr.bf16.mxu0 0
          %623 = vmatpush1.bf16.msra.mxu0 0
          %624 = vmatprep.subr.bf16.mxu0 0
          %625 = vmatpush1.bf16.msra.mxu0 0
          %626 = vmatprep.subr.bf16.mxu0 0
          %627 = vmatpush1.bf16.msra.mxu0 0
          %628 = vmatprep.subr.bf16.mxu0 0
          %629 = vmatpush1.bf16.msra.mxu0 0
          %630 = vmatprep.subr.bf16.mxu0 0
          %631 = vmatpush1.bf16.msra.mxu0 %v612
          %632 = vmatprep.subr.bf16.mxu0 0
          %633 = vmatpush1.bf16.msra.mxu0 %v611
          %634 = vmatprep.subr.bf16.mxu0 0
          %635 = vmatpush2.bf16.msra.mxu0 0
          %636 = vmatprep.subr.bf16.mxu0 0
          %637 = vmatpush2.bf16.msra.mxu0 0
          %638 = vmatprep.subr.bf16.mxu0 0
          %639 = vmatpush2.bf16.msra.mxu0 0
          %640 = vmatprep.subr.bf16.mxu0 0
          %641 = vmatpush2.bf16.msra.mxu0 0
          %642 = vmatprep.subr.bf16.mxu0 0
          %643 = vmatpush2.bf16.msra.mxu0 0
          %644 = vmatprep.subr.bf16.mxu0 0
          %645 = vmatpush2.bf16.msra.mxu0 0
          %646 = vmatprep.subr.bf16.mxu0 0
          %647 = vmatpush2.bf16.msra.mxu0 0
          %648 = vmatprep.subr.bf16.mxu0 0
          %649 = vmatpush2.bf16.msra.mxu0 0
          %650 = vmatprep.mubr.bf16.mxu0 0
          %651 = vmatmul.mubr.bf16.gmra.mxu0 %v616
          %v652 = vpop.f32.mrf.mxu0
          %v653 = vadd.f32 0.0, %v652
          %v654 = vpop.f32.mrf.mxu0
          %v655 = vpop.f32.mrf.mxu0
          %v656 = vpop.f32.mrf.mxu0
          %657 = vdwg.mxu0
          %v658 = vpack.c.bf16 %v653, %v653
          %vm659 = vcmask 257024
          %660 = vst.msk [vmem:[#allocation2] sm:$0xf] %vm659, %v658
          %v661 = vld [vmem:[#allocation4] sm:$0xf]
          %v662 = vld [vmem:[#allocation4 + $0x4] sm:$0xf]
          %v663 = vld [vmem:[#allocation4 + $0x8] sm:$0xf]
          %v664 = vld [vmem:[#allocation4 + $0xc] sm:$0xf]
          %v669 = vunpack.c.l.b16 %v661
          %v670 = vunpack.c.l.b16 %v662
          %v671 = vunpack.c.l.b16 %v663
          %v672 = vunpack.c.l.b16 %v664
          %v673 = vpack.c.b16 %v670, %v669
          %v674 = vpack.c.b16 %v672, %v671
          %677 = vmatprep.subr.bf16.mxu0 0
          %678 = vmatpush1.bf16.msra.mxu0 0
          %679 = vmatprep.subr.bf16.mxu0 0
          %680 = vmatpush1.bf16.msra.mxu0 0
          %681 = vmatprep.subr.bf16.mxu0 0
          %682 = vmatpush1.bf16.msra.mxu0 0
          %683 = vmatprep.subr.bf16.mxu0 0
          %684 = vmatpush1.bf16.msra.mxu0 0
          %685 = vmatprep.subr.bf16.mxu0 0
          %686 = vmatpush1.bf16.msra.mxu0 0
          %687 = vmatprep.subr.bf16.mxu0 0
          %688 = vmatpush1.bf16.msra.mxu0 0
          %689 = vmatprep.subr.bf16.mxu0 0
          %690 = vmatpush1.bf16.msra.mxu0 %v674
          %691 = vmatprep.subr.bf16.mxu0 0
          %692 = vmatpush1.bf16.msra.mxu0 %v673
          %693 = vmatprep.subr.bf16.mxu0 0
          %694 = vmatpush2.bf16.msra.mxu0 0
          %695 = vmatprep.subr.bf16.mxu0 0
          %696 = vmatpush2.bf16.msra.mxu0 0
          %697 = vmatprep.subr.bf16.mxu0 0
          %698 = vmatpush2.bf16.msra.mxu0 0
          %699 = vmatprep.subr.bf16.mxu0 0
          %700 = vmatpush2.bf16.msra.mxu0 0
          %701 = vmatprep.subr.bf16.mxu0 0
          %702 = vmatpush2.bf16.msra.mxu0 0
          %703 = vmatprep.subr.bf16.mxu0 0
          %704 = vmatpush2.bf16.msra.mxu0 0
          %705 = vmatprep.subr.bf16.mxu0 0
          %706 = vmatpush2.bf16.msra.mxu0 0
          %707 = vmatprep.subr.bf16.mxu0 0
          %708 = vmatpush2.bf16.msra.mxu0 0
          %709 = vmatprep.mubr.bf16.mxu0 0
          %710 = vmatmul.mubr.bf16.gmra.mxu0 %v616
          %v711 = vpop.f32.mrf.mxu0
          %v712 = vadd.f32 0.0, %v711
          %v713 = vpop.f32.mrf.mxu0
          %v714 = vpop.f32.mrf.mxu0
          %v715 = vpop.f32.mrf.mxu0
          %716 = vdwg.mxu0
          %v717 = vpack.c.bf16 %v712, %v712
          %718 = vst.msk [vmem:[#allocation3] sm:$0xf] %vm659, %v717
        $region100: #{tpu_custom_call.1} parent=79 // pred_fallthru
          _
        %s719 = smul.u32 %s37, 8
        %s720 = scalar_lea.vmem %s560, %s719
        %v721 = vld [vmem:[%s720] sm:$0xff]
        %v722 = vld [vmem:[%s1] sm:$0x1]
        %v723 = vld [vmem:[%s2] sm:$0x1]
        %vm724 = vcmask 261120
        %v725 = vsel %vm724, %v721, 0.0
        %726 = vadd.xlane.f32.xlu0 %v725
        %v727 = vpop.xlane.xlu0 %726
        %v728 = vrcp.pop 32.0
        %v729 = vmul.f32 %v727, %v728
        %v730 = vsub.f32 %v721, %v729
        %v731 = vmul.f32 %v730, %v730
        %v732 = vsel %vm724, %v731, 0.0
        %733 = vadd.xlane.f32.xlu0 %v732
        %v734 = vpop.xlane.xlu0 %733
        %v735 = vmul.f32 %v734, %v728
        %v736 = vadd.f32 %v735, 1e-05
        %v737 = vrsqrt.pop %v736
        %v738 = vmul.f32 %v730, %v737
        %v740 = vlaneseq
        %v741 = vshrl.u32 %v740, 7
        %v742 = vsub.s32 0, %v741
        %v743 = vrot.slane %v722, %v742
        %v745 = vmul.f32 %v738, %v743
        %v747 = vlaneseq
        %v748 = vshrl.u32 %v747, 7
        %v749 = vsub.s32 0, %v748
        %v750 = vrot.slane %v723, %v749
        %v752 = vadd.f32 %v745, %v750
        %v753 = vpack.c.bf16 %v752, %v752
        %v754 = vld [vmem:[%s3] sm:$0xf]
        %v755 = vld [vmem:[%s3 + $0x4] sm:$0xf]
        %v756 = vld [vmem:[%s3 + $0x8] sm:$0xf]
        %v757 = vld [vmem:[%s3 + $0xc] sm:$0xf]
        %v762 = vunpack.c.l.b16 %v754
        %v763 = vunpack.c.l.b16 %v755
        %v764 = vunpack.c.l.b16 %v756
        %v765 = vunpack.c.l.b16 %v757
        %v766 = vpack.c.b16 %v763, %v762
        %v767 = vpack.c.b16 %v765, %v764
        %v771 = vsel %vm724, %v753, 0
        %773 = vmatprep.subr.bf16.mxu0 0
        %774 = vmatpush1.bf16.msra.mxu0 0
        %775 = vmatprep.subr.bf16.mxu0 0
        %776 = vmatpush1.bf16.msra.mxu0 0
        %777 = vmatprep.subr.bf16.mxu0 0
        %778 = vmatpush1.bf16.msra.mxu0 0
        %779 = vmatprep.subr.bf16.mxu0 0
        %780 = vmatpush1.bf16.msra.mxu0 0
        %781 = vmatprep.subr.bf16.mxu0 0
        %782 = vmatpush1.bf16.msra.mxu0 0
        %783 = vmatprep.subr.bf16.mxu0 0
        %784 = vmatpush1.bf16.msra.mxu0 0
        %785 = vmatprep.subr.bf16.mxu0 0
        %786 = vmatpush1.bf16.msra.mxu0 %v767
        %787 = vmatprep.subr.bf16.mxu0 0
        %788 = vmatpush1.bf16.msra.mxu0 %v766
        %789 = vmatprep.subr.bf16.mxu0 0
        %790 = vmatpush2.bf16.msra.mxu0 0
        %791 = vmatprep.subr.bf16.mxu0 0
        %792 = vmatpush2.bf16.msra.mxu0 0
        %793 = vmatprep.subr.bf16.mxu0 0
        %794 = vmatpush2.bf16.msra.mxu0 0
        %795 = vmatprep.subr.bf16.mxu0 0
        %796 = vmatpush2.bf16.msra.mxu0 0
        %797 = vmatprep.subr.bf16.mxu0 0
        %798 = vmatpush2.bf16.msra.mxu0 0
        %799 = vmatprep.subr.bf16.mxu0 0
        %800 = vmatpush2.bf16.msra.mxu0 0
        %801 = vmatprep.subr.bf16.mxu0 0
        %802 = vmatpush2.bf16.msra.mxu0 0
        %803 = vmatprep.subr.bf16.mxu0 0
        %804 = vmatpush2.bf16.msra.mxu0 0
        %805 = vmatprep.mubr.bf16.mxu0 0
        %806 = vmatmul.mubr.bf16.gmra.mxu0 %v771
        %v807 = vpop.f32.mrf.mxu0
        %v808 = vadd.f32 0.0, %v807
        %v809 = vpop.f32.mrf.mxu0
        %v810 = vpop.f32.mrf.mxu0
        %v811 = vpop.f32.mrf.mxu0
        %812 = vdwg.mxu0
        %v813 = vpack.c.bf16 %v808, %v808
        %v814 = vld [vmem:[#allocation2] sm:$0xf]
        %v815 = vld [vmem:[#allocation3] sm:$0xf]
        %vm816 = vcmask 130048
        %v818 = vsel %vm816, %v813, 0
        %v821 = vsel %vm816, %v814, 0
        %823 = vmatprep.subr.bf16.mxu0 0
        %824 = vmatpush1.bf16.xpose.msra.mxu0 0
        %825 = vmatprep.subr.bf16.mxu0 0
        %826 = vmatpush1.bf16.xpose.msra.mxu0 0
        %827 = vmatprep.subr.bf16.mxu0 0
        %828 = vmatpush1.bf16.xpose.msra.mxu0 0
        %829 = vmatprep.subr.bf16.mxu0 0
        %830 = vmatpush1.bf16.xpose.msra.mxu0 0
        %831 = vmatprep.subr.bf16.mxu0 0
        %832 = vmatpush1.bf16.xpose.msra.mxu0 0
        %833 = vmatprep.subr.bf16.mxu0 0
        %834 = vmatpush1.bf16.xpose.msra.mxu0 0
        %835 = vmatprep.subr.bf16.mxu0 0
        %836 = vmatpush1.bf16.xpose.msra.mxu0 0
        %837 = vmatprep.subr.bf16.mxu0 0
        %838 = vmatpush1.bf16.xpose.msra.mxu0 %v821
        %839 = vmatprep.subr.bf16.mxu0 0
        %840 = vmatpush2.bf16.xpose.msra.mxu0 0
        %841 = vmatprep.subr.bf16.mxu0 0
        %842 = vmatpush2.bf16.xpose.msra.mxu0 0
        %843 = vmatprep.subr.bf16.mxu0 0
        %844 = vmatpush2.bf16.xpose.msra.mxu0 0
        %845 = vmatprep.subr.bf16.mxu0 0
        %846 = vmatpush2.bf16.xpose.msra.mxu0 0
        %847 = vmatprep.subr.bf16.mxu0 0
        %848 = vmatpush2.bf16.xpose.msra.mxu0 0
        %849 = vmatprep.subr.bf16.mxu0 0
        %850 = vmatpush2.bf16.xpose.msra.mxu0 0
        %851 = vmatprep.subr.bf16.mxu0 0
        %852 = vmatpush2.bf16.xpose.msra.mxu0 0
        %853 = vmatprep.subr.bf16.mxu0 0
        %854 = vmatpush2.bf16.xpose.msra.mxu0 0
        %855 = vmatprep.mubr.bf16.mxu0 0
        %856 = vmatmul.mubr.bf16.gmra.mxu0 %v818
        %v857 = vpop.f32.mrf.mxu0
        %v858 = vadd.f32 0.0, %v857
        %v859 = vpop.f32.mrf.mxu0
        %v860 = vpop.f32.mrf.mxu0
        %v861 = vpop.f32.mrf.mxu0
        %862 = vdwg.mxu0
        %vm863 = vcmask 64512
        %v864 = vsel %vm863, %v858, -inf
        %865 = vmax.xlane.f32.xlu0 %v864
        %v866 = vpop.xlane.xlu0 %865
        %v867 = vsub.f32 %v858, %v866
        %v868 = vmul.f32 %v867, 1.442695
        %v869 = vpow.pop %v868
        %v870 = vsel %vm863, %v869, 0.0
        %871 = vadd.xlane.f32.xlu0 %v870
        %v872 = vpop.xlane.xlu0 %871
        %v873 = vrcp.pop %v872
        %v874 = vmul.f32 %v869, %v873
        %v875 = vpack.c.bf16 %v874, %v874
        %v877 = vsel %vm863, %v875, 0
        %vm879 = vcmask 1043456
        %v881 = vsel %vm879, %v815, 0
        %883 = vmatprep.subr.bf16.mxu0 0
        %884 = vmatpush1.bf16.msra.mxu0 0
        %885 = vmatprep.subr.bf16.mxu0 0
        %886 = vmatpush1.bf16.msra.mxu0 0
        %887 = vmatprep.subr.bf16.mxu0 0
        %888 = vmatpush1.bf16.msra.mxu0 0
        %889 = vmatprep.subr.bf16.mxu0 0
        %890 = vmatpush1.bf16.msra.mxu0 0
        %891 = vmatprep.subr.bf16.mxu0 0
        %892 = vmatpush1.bf16.msra.mxu0 0
        %893 = vmatprep.subr.bf16.mxu0 0
        %894 = vmatpush1.bf16.msra.mxu0 0
        %895 = vmatprep.subr.bf16.mxu0 0
        %896 = vmatpush1.bf16.msra.mxu0 0
        %897 = vmatprep.subr.bf16.mxu0 0
        %898 = vmatpush1.bf16.msra.mxu0 %v881
        %899 = vmatprep.subr.bf16.mxu0 0
        %900 = vmatpush2.bf16.msra.mxu0 0
        %901 = vmatprep.subr.bf16.mxu0 0
        %902 = vmatpush2.bf16.msra.mxu0 0
        %903 = vmatprep.subr.bf16.mxu0 0
        %904 = vmatpush2.bf16.msra.mxu0 0
        %905 = vmatprep.subr.bf16.mxu0 0
        %906 = vmatpush2.bf16.msra.mxu0 0
        %907 = vmatprep.subr.bf16.mxu0 0
        %908 = vmatpush2.bf16.msra.mxu0 0
        %909 = vmatprep.subr.bf16.mxu0 0
        %910 = vmatpush2.bf16.msra.mxu0 0
        %911 = vmatprep.subr.bf16.mxu0 0
        %912 = vmatpush2.bf16.msra.mxu0 0
        %913 = vmatprep.subr.bf16.mxu0 0
        %914 = vmatpush2.bf16.msra.mxu0 0
        %915 = vmatprep.mubr.bf16.mxu0 0
        %916 = vmatmul.mubr.bf16.gmra.mxu0 %v877
        %v917 = vpop.f32.mrf.mxu0
        %v918 = vadd.f32 0.0, %v917
        %v919 = vpop.f32.mrf.mxu0
        %v920 = vpop.f32.mrf.mxu0
        %v921 = vpop.f32.mrf.mxu0
        %922 = vdwg.mxu0
        %v923 = vpack.c.bf16 %v918, %v918
        %925 = vrot.lane.b32.xlu0 %v813, 112
        %v926 = vpop.permute.xlu0 %925
        %v928 = vunpack.c.l.b16 %v814
        %v929 = vpack.c.b16 %v928, %v928
        %930 = vrot.lane.b32.xlu0 %v929, 112
        %v931 = vpop.permute.xlu0 %930
        %v933 = vsel %vm816, %v926, 0
        %v936 = vsel %vm816, %v931, 0
        %938 = vmatprep.subr.bf16.mxu0 0
        %939 = vmatpush1.bf16.xpose.msra.mxu0 0
        %940 = vmatprep.subr.bf16.mxu0 0
        %941 = vmatpush1.bf16.xpose.msra.mxu0 0
        %942 = vmatprep.subr.bf16.mxu0 0
        %943 = vmatpush1.bf16.xpose.msra.mxu0 0
        %944 = vmatprep.subr.bf16.mxu0 0
        %945 = vmatpush1.bf16.xpose.msra.mxu0 0
        %946 = vmatprep.subr.bf16.mxu0 0
        %947 = vmatpush1.bf16.xpose.msra.mxu0 0
        %948 = vmatprep.subr.bf16.mxu0 0
        %949 = vmatpush1.bf16.xpose.msra.mxu0 0
        %950 = vmatprep.subr.bf16.mxu0 0
        %951 = vmatpush1.bf16.xpose.msra.mxu0 0
        %952 = vmatprep.subr.bf16.mxu0 0
        %953 = vmatpush1.bf16.xpose.msra.mxu0 %v936
        %954 = vmatprep.subr.bf16.mxu0 0
        %955 = vmatpush2.bf16.xpose.msra.mxu0 0
        %956 = vmatprep.subr.bf16.mxu0 0
        %957 = vmatpush2.bf16.xpose.msra.mxu0 0
        %958 = vmatprep.subr.bf16.mxu0 0
        %959 = vmatpush2.bf16.xpose.msra.mxu0 0
        %960 = vmatprep.subr.bf16.mxu0 0
        %961 = vmatpush2.bf16.xpose.msra.mxu0 0
        %962 = vmatprep.subr.bf16.mxu0 0
        %963 = vmatpush2.bf16.xpose.msra.mxu0 0
        %964 = vmatprep.subr.bf16.mxu0 0
        %965 = vmatpush2.bf16.xpose.msra.mxu0 0
        %966 = vmatprep.subr.bf16.mxu0 0
        %967 = vmatpush2.bf16.xpose.msra.mxu0 0
        %968 = vmatprep.subr.bf16.mxu0 0
        %969 = vmatpush2.bf16.xpose.msra.mxu0 0
        %970 = vmatprep.mubr.bf16.mxu0 0
        %971 = vmatmul.mubr.bf16.gmra.mxu0 %v933
        %v972 = vpop.f32.mrf.mxu0
        %v973 = vadd.f32 0.0, %v972
        %v974 = vpop.f32.mrf.mxu0
        %v975 = vpop.f32.mrf.mxu0
        %v976 = vpop.f32.mrf.mxu0
        %977 = vdwg.mxu0
        %v978 = vsel %vm863, %v973, -inf
        %979 = vmax.xlane.f32.xlu0 %v978
        %v980 = vpop.xlane.xlu0 %979
        %v981 = vsub.f32 %v973, %v980
        %v982 = vmul.f32 %v981, 1.442695
        %v983 = vpow.pop %v982
        %v984 = vsel %vm863, %v983, 0.0
        %985 = vadd.xlane.f32.xlu0 %v984
        %v986 = vpop.xlane.xlu0 %985
        %v987 = vrcp.pop %v986
        %v988 = vmul.f32 %v983, %v987
        %v989 = vpack.c.bf16 %v988, %v988
        %v991 = vunpack.c.l.b16 %v815
        %v992 = vpack.c.b16 %v991, %v991
        %993 = vrot.lane.b32.xlu0 %v992, 112
        %v994 = vpop.permute.xlu0 %993
        %v996 = vsel %vm863, %v989, 0
        %v999 = vsel %vm879, %v994, 0
        %1001 = vmatprep.subr.bf16.mxu0 0
        %1002 = vmatpush1.bf16.msra.mxu0 0
        %1003 = vmatprep.subr.bf16.mxu0 0
        %1004 = vmatpush1.bf16.msra.mxu0 0
        %1005 = vmatprep.subr.bf16.mxu0 0
        %1006 = vmatpush1.bf16.msra.mxu0 0
        %1007 = vmatprep.subr.bf16.mxu0 0
        %1008 = vmatpush1.bf16.msra.mxu0 0
        %1009 = vmatprep.subr.bf16.mxu0 0
        %1010 = vmatpush1.bf16.msra.mxu0 0
        %1011 = vmatprep.subr.bf16.mxu0 0
        %1012 = vmatpush1.bf16.msra.mxu0 0
        %1013 = vmatprep.subr.bf16.mxu0 0
        %1014 = vmatpush1.bf16.msra.mxu0 0
        %1015 = vmatprep.subr.bf16.mxu0 0
        %1016 = vmatpush1.bf16.msra.mxu0 %v999
        %1017 = vmatprep.subr.bf16.mxu0 0
        %1018 = vmatpush2.bf16.msra.mxu0 0
        %1019 = vmatprep.subr.bf16.mxu0 0
        %1020 = vmatpush2.bf16.msra.mxu0 0
        %1021 = vmatprep.subr.bf16.mxu0 0
        %1022 = vmatpush2.bf16.msra.mxu0 0
        %1023 = vmatprep.subr.bf16.mxu0 0
        %1024 = vmatpush2.bf16.msra.mxu0 0
        %1025 = vmatprep.subr.bf16.mxu0 0
        %1026 = vmatpush2.bf16.msra.mxu0 0
        %1027 = vmatprep.subr.bf16.mxu0 0
        %1028 = vmatpush2.bf16.msra.mxu0 0
        %1029 = vmatprep.subr.bf16.mxu0 0
        %1030 = vmatpush2.bf16.msra.mxu0 0
        %1031 = vmatprep.subr.bf16.mxu0 0
        %1032 = vmatpush2.bf16.msra.mxu0 0
        %1033 = vmatprep.mubr.bf16.mxu0 0
        %1034 = vmatmul.mubr.bf16.gmra.mxu0 %v996
        %v1035 = vpop.f32.mrf.mxu0
        %v1036 = vadd.f32 0.0, %v1035
        %v1037 = vpop.f32.mrf.mxu0
        %v1038 = vpop.f32.mrf.mxu0
        %v1039 = vpop.f32.mrf.mxu0
        %1040 = vdwg.mxu0
        %v1041 = vpack.c.bf16 %v1036, %v1036
        %1043 = vrot.lane.b32.xlu0 %v1041, 16
        %v1044 = vpop.permute.xlu0 %1043
        %v1047 = vsel %vm816, %v923, %v1044
        %v1048 = vld [vmem:[#allocation7] sm:$0xf]
        %v1049 = vld [vmem:[#allocation7 + $0x4] sm:$0xf]
        %v1050 = vld [vmem:[#allocation7 + $0x8] sm:$0xf]
        %v1051 = vld [vmem:[#allocation7 + $0xc] sm:$0xf]
        %v1056 = vunpack.c.l.b16 %v1048
        %v1057 = vunpack.c.l.b16 %v1049
        %v1058 = vunpack.c.l.b16 %v1050
        %v1059 = vunpack.c.l.b16 %v1051
        %v1060 = vpack.c.b16 %v1057, %v1056
        %v1061 = vpack.c.b16 %v1059, %v1058
        %v1064 = vsel %vm724, %v1047, 0
        %1066 = vmatprep.subr.bf16.mxu0 0
        %1067 = vmatpush1.bf16.msra.mxu0 0
        %1068 = vmatprep.subr.bf16.mxu0 0
        %1069 = vmatpush1.bf16.msra.mxu0 0
        %1070 = vmatprep.subr.bf16.mxu0 0
        %1071 = vmatpush1.bf16.msra.mxu0 0
        %1072 = vmatprep.subr.bf16.mxu0 0
        %1073 = vmatpush1.bf16.msra.mxu0 0
        %1074 = vmatprep.subr.bf16.mxu0 0
        %1075 = vmatpush1.bf16.msra.mxu0 0
        %1076 = vmatprep.subr.bf16.mxu0 0
        %1077 = vmatpush1.bf16.msra.mxu0 0
        %1078 = vmatprep.subr.bf16.mxu0 0
        %1079 = vmatpush1.bf16.msra.mxu0 %v1061
        %1080 = vmatprep.subr.bf16.mxu0 0
        %1081 = vmatpush1.bf16.msra.mxu0 %v1060
        %1082 = vmatprep.subr.bf16.mxu0 0
        %1083 = vmatpush2.bf16.msra.mxu0 0
        %1084 = vmatprep.subr.bf16.mxu0 0
        %1085 = vmatpush2.bf16.msra.mxu0 0
        %1086 = vmatprep.subr.bf16.mxu0 0
        %1087 = vmatpush2.bf16.msra.mxu0 0
        %1088 = vmatprep.subr.bf16.mxu0 0
        %1089 = vmatpush2.bf16.msra.mxu0 0
        %1090 = vmatprep.subr.bf16.mxu0 0
        %1091 = vmatpush2.bf16.msra.mxu0 0
        %1092 = vmatprep.subr.bf16.mxu0 0
        %1093 = vmatpush2.bf16.msra.mxu0 0
        %1094 = vmatprep.subr.bf16.mxu0 0
        %1095 = vmatpush2.bf16.msra.mxu0 0
        %1096 = vmatprep.subr.bf16.mxu0 0
        %1097 = vmatpush2.bf16.msra.mxu0 0
        %1098 = vmatprep.mubr.bf16.mxu0 0
        %1099 = vmatmul.mubr.bf16.gmra.mxu0 %v1064
        %v1100 = vpop.f32.mrf.mxu0
        %v1101 = vadd.f32 %v721, %v1100
        %v1102 = vpop.f32.mrf.mxu0
        %v1103 = vpop.f32.mrf.mxu0
        %v1104 = vpop.f32.mrf.mxu0
        %1105 = vdwg.mxu0
        %v1106 = vld [vmem:[%s7] sm:$0x1]
        %v1107 = vld [vmem:[%s8] sm:$0x1]
        %v1108 = vsel %vm724, %v1101, 0.0
        %1109 = vadd.xlane.f32.xlu0 %v1108
        %v1110 = vpop.xlane.xlu0 %1109
        %v1111 = vmul.f32 %v1110, %v728
        %v1112 = vsub.f32 %v1101, %v1111
        %v1113 = vmul.f32 %v1112, %v1112
        %v1114 = vsel %vm724, %v1113, 0.0
        %1115 = vadd.xlane.f32.xlu0 %v1114
        %v1116 = vpop.xlane.xlu0 %1115
        %v1117 = vmul.f32 %v1116, %v728
        %v1118 = vadd.f32 %v1117, 1e-05
        %v1119 = vrsqrt.pop %v1118
        %v1120 = vmul.f32 %v1112, %v1119
        %v1122 = vlaneseq
        %v1123 = vshrl.u32 %v1122, 7
        %v1124 = vsub.s32 0, %v1123
        %v1125 = vrot.slane %v1106, %v1124
        %v1127 = vmul.f32 %v1120, %v1125
        %v1129 = vlaneseq
        %v1130 = vshrl.u32 %v1129, 7
        %v1131 = vsub.s32 0, %v1130
        %v1132 = vrot.slane %v1107, %v1131
        %v1134 = vadd.f32 %v1127, %v1132
        %v1135 = vpack.c.bf16 %v1134, %v1134
        %v1136 = vld [vmem:[#allocation9] sm:$0xf]
        %v1137 = vld [vmem:[#allocation9 + $0x4] sm:$0xf]
        %v1138 = vld [vmem:[#allocation9 + $0x8] sm:$0xf]
        %v1139 = vld [vmem:[#allocation9 + $0xc] sm:$0xf]
        %v1140 = vld [vmem:[#allocation10] sm:$0x1]
        %v1142 = vlaneseq
        %v1143 = vshrl.u32 %v1142, 7
        %v1144 = vsub.s32 0, %v1143
        %v1145 = vrot.slane %v1140, %v1144
        %v1151 = vunpack.c.l.b16 %v1136
        %v1152 = vunpack.c.l.b16 %v1137
        %v1153 = vunpack.c.l.b16 %v1138
        %v1154 = vunpack.c.l.b16 %v1139
        %v1155 = vpack.c.b16 %v1152, %v1151
        %v1156 = vpack.c.b16 %v1154, %v1153
        %v1160 = vsel %vm724, %v1135, 0
        %1162 = vmatprep.subr.bf16.mxu0 0
        %1163 = vmatpush1.bf16.msra.mxu0 0
        %1164 = vmatprep.subr.bf16.mxu0 0
        %1165 = vmatpush1.bf16.msra.mxu0 0
        %1166 = vmatprep.subr.bf16.mxu0 0
        %1167 = vmatpush1.bf16.msra.mxu0 0
        %1168 = vmatprep.subr.bf16.mxu0 0
        %1169 = vmatpush1.bf16.msra.mxu0 0
        %1170 = vmatprep.subr.bf16.mxu0 0
        %1171 = vmatpush1.bf16.msra.mxu0 0
        %1172 = vmatprep.subr.bf16.mxu0 0
        %1173 = vmatpush1.bf16.msra.mxu0 0
        %1174 = vmatprep.subr.bf16.mxu0 0
        %1175 = vmatpush1.bf16.msra.mxu0 %v1156
        %1176 = vmatprep.subr.bf16.mxu0 0
        %1177 = vmatpush1.bf16.msra.mxu0 %v1155
        %1178 = vmatprep.subr.bf16.mxu0 0
        %1179 = vmatpush2.bf16.msra.mxu0 0
        %1180 = vmatprep.subr.bf16.mxu0 0
        %1181 = vmatpush2.bf16.msra.mxu0 0
        %1182 = vmatprep.subr.bf16.mxu0 0
        %1183 = vmatpush2.bf16.msra.mxu0 0
        %1184 = vmatprep.subr.bf16.mxu0 0
        %1185 = vmatpush2.bf16.msra.mxu0 0
        %1186 = vmatprep.subr.bf16.mxu0 0
        %1187 = vmatpush2.bf16.msra.mxu0 0
        %1188 = vmatprep.subr.bf16.mxu0 0
        %1189 = vmatpush2.bf16.msra.mxu0 0
        %1190 = vmatprep.subr.bf16.mxu0 0
        %1191 = vmatpush2.bf16.msra.mxu0 0
        %1192 = vmatprep.subr.bf16.mxu0 0
        %1193 = vmatpush2.bf16.msra.mxu0 0
        %1194 = vmatprep.mubr.bf16.mxu0 0
        %1195 = vmatmul.mubr.bf16.gmra.mxu0 %v1160
        %v1196 = vpop.f32.mrf.mxu0
        %v1197 = vadd.f32 %v1145, %v1196
        %v1198 = vpop.f32.mrf.mxu0
        %v1199 = vpop.f32.mrf.mxu0
        %v1200 = vpop.f32.mrf.mxu0
        %1201 = vdwg.mxu0
        %v1202 = vmax.f32 %v1197, 0.0
        %v1203 = vpack.c.bf16 %v1202, %v1202
        %v1204 = vld [vmem:[%s11] sm:$0xf]
        %v1205 = vld [vmem:[%s11 + $0x4] sm:$0xf]
        %v1206 = vld [vmem:[%s11 + $0x8] sm:$0xf]
        %v1207 = vld [vmem:[%s11 + $0xc] sm:$0xf]
        %v1208 = vld [vmem:[%s11 + $0x10] sm:$0xf]
        %v1209 = vld [vmem:[%s11 + $0x14] sm:$0xf]
        %v1210 = vld [vmem:[%s11 + $0x18] sm:$0xf]
        %v1211 = vld [vmem:[%s11 + $0x1c] sm:$0xf]
        %v1212 = vld [vmem:[%s12] sm:$0x1]
        %v1214 = vlaneseq
        %v1215 = vshrl.u32 %v1214, 7
        %v1216 = vsub.s32 0, %v1215
        %v1217 = vrot.slane %v1212, %v1216
        %v1227 = vunpack.c.l.b16 %v1204
        %v1228 = vunpack.c.l.b16 %v1205
        %v1229 = vunpack.c.l.b16 %v1206
        %v1230 = vunpack.c.l.b16 %v1207
        %v1231 = vunpack.c.l.b16 %v1208
        %v1232 = vunpack.c.l.b16 %v1209
        %v1233 = vunpack.c.l.b16 %v1210
        %v1234 = vunpack.c.l.b16 %v1211
        %v1235 = vpack.c.b16 %v1228, %v1227
        %v1236 = vpack.c.b16 %v1230, %v1229
        %v1237 = vpack.c.b16 %v1232, %v1231
        %v1238 = vpack.c.b16 %v1234, %v1233
        %vm1243 = vcmask 523264
        %v1245 = vsel %vm1243, %v1203, 0
        %1247 = vmatprep.subr.bf16.mxu0 0
        %1248 = vmatpush1.bf16.msra.mxu0 0
        %1249 = vmatprep.subr.bf16.mxu0 0
        %1250 = vmatpush1.bf16.msra.mxu0 0
        %1251 = vmatprep.subr.bf16.mxu0 0
        %1252 = vmatpush1.bf16.msra.mxu0 0
        %1253 = vmatprep.subr.bf16.mxu0 0
        %1254 = vmatpush1.bf16.msra.mxu0 0
        %1255 = vmatprep.subr.bf16.mxu0 0
        %1256 = vmatpush1.bf16.msra.mxu0 %v1238
        %1257 = vmatprep.subr.bf16.mxu0 0
        %1258 = vmatpush1.bf16.msra.mxu0 %v1237
        %1259 = vmatprep.subr.bf16.mxu0 0
        %1260 = vmatpush1.bf16.msra.mxu0 %v1236
        %1261 = vmatprep.subr.bf16.mxu0 0
        %1262 = vmatpush1.bf16.msra.mxu0 %v1235
        %1263 = vmatprep.subr.bf16.mxu0 0
        %1264 = vmatpush2.bf16.msra.mxu0 0
        %1265 = vmatprep.subr.bf16.mxu0 0
        %1266 = vmatpush2.bf16.msra.mxu0 0
        %1267 = vmatprep.subr.bf16.mxu0 0
        %1268 = vmatpush2.bf16.msra.mxu0 0
        %1269 = vmatprep.subr.bf16.mxu0 0
        %1270 = vmatpush2.bf16.msra.mxu0 0
        %1271 = vmatprep.subr.bf16.mxu0 0
        %1272 = vmatpush2.bf16.msra.mxu0 0
        %1273 = vmatprep.subr.bf16.mxu0 0
        %1274 = vmatpush2.bf16.msra.mxu0 0
        %1275 = vmatprep.subr.bf16.mxu0 0
        %1276 = vmatpush2.bf16.msra.mxu0 0
        %1277 = vmatprep.subr.bf16.mxu0 0
        %1278 = vmatpush2.bf16.msra.mxu0 0
        %1279 = vmatprep.mubr.bf16.mxu0 0
        %1280 = vmatmul.mubr.bf16.gmra.mxu0 %v1245
        %v1281 = vpop.f32.mrf.mxu0
        %v1282 = vadd.f32 %v1217, %v1281
        %v1283 = vpop.f32.mrf.mxu0
        %v1284 = vpop.f32.mrf.mxu0
        %v1285 = vpop.f32.mrf.mxu0
        %1286 = vdwg.mxu0
        %v1287 = vadd.f32 %v1282, %v1101
        %1288 = vst.msk [vmem:[%s556] sm:$0xff] %vm724, %v1287
        %s1289 = sand.u32 %s374, 1
        %s1290 = scalar_lea.sflag [#allocation6], %s1289
        %s1291 = sand.u32 %s374, 1
        %s1292 = smul.addr %s1291, 8
        %s1293 = scalar_lea.vmem [#allocation12], %s1292
        // Predicated region
        $region101: #{tpu_custom_call.1} parent=79 // pred_check
          %p1294 = pneg %p384
        $region102: #{tpu_custom_call.1} parent=79 // pred_check_branch
          %1296 = sbr.rel (%p1294) target = $region104
        $region103: #{tpu_custom_call.1} parent=79 // pred_region
          %s1298 = ssub.s32 128, 128
          %1299 = vsyncadd %s1290, %s1298
          %s1300 = sadd.s32 %s37, %s36
          %s1301 = smul.addr %s1300, 128
          %s1302 = scalar_lea.hbm %s15, %s1301
          %s1304 = sshll.u32 %s1293, 4
          %s1305 = int_to_ptr.vmem [resolvable:$true] %s1304
          %1307 = dma.vmem_to_hbm [thread:$0]  %s1305, 128, %s1302, %s1290
        $region104: #{tpu_custom_call.1} parent=79 // pred_fallthru
          _
      $region80: #{tpu_custom_call.1} parent=5 // pred_fallthru
        _
      %p1308 = scmp.le.s32.totalorder 2, %s27
      // Predicated region
      $region105: #{tpu_custom_call.1} parent=5 // pred_check
        %p1309 = pneg %p1308
      $region106: #{tpu_custom_call.1} parent=5 // pred_check_branch
        %1311 = sbr.rel (%p1309) target = $region108
      $region107: #{tpu_custom_call.1} parent=5 // pred_region
        %s1312 = ssub.s32 %s27, 2
        // Predicated region
        $region109: #{tpu_custom_call.1} parent=107 // pred_check
          %p1313 = pneg %p390
        $region110: #{tpu_custom_call.1} parent=107 // pred_check_branch
          %1315 = sbr.rel (%p1313) target = $region112
        $region111: #{tpu_custom_call.1} parent=107 // pred_region
          %s1316 = sand.u32 %s375, 1
          %s1317 = scalar_lea.sflag [#allocation6], %s1316
          %s1318 = sand.u32 %s375, 1
          %s1319 = smul.addr %s1318, 8
          %s1320 = scalar_lea.vmem [#allocation12], %s1319
          %1321 = dma.done %s1317, 128
        $region112: #{tpu_custom_call.1} parent=107 // pred_fallthru
          _
      $region108: #{tpu_custom_call.1} parent=5 // pred_fallthru
        _
    $region6: #{tpu_custom_call.1} parent=1 // loop_footer
      %s31 = sadd.s32 1, %s27
    $region7: #{tpu_custom_call.1} parent=1 // loop_footer_branch
      %26 = sbr.rel target = $region3
    $region8: #{tpu_custom_call.1} parent=1 // loop_exit
      _
    %1322 = vsyncpa [#allocation5], 1
    %s1323 = scalar_lea.sflag [#allocation5], 1
    %1324 = vsyncpa %s1323, 1
    %1325 = vsyncpa [#allocation8], 1
    %1326 = vsyncpa [#allocation11], 1
    %1327 = vsyncpa [#allocation6], 1
    %s1328 = scalar_lea.sflag [#allocation6], 1
    %1329 = vsyncpa %s1328, 1

</llo_original>
